<compile_context>
chip_gen: v7x
topology: tpu7x:2x2x1
jax: 0.10.0
libtpu: 0.0.40
codegen_flags: <defaults>
</compile_context>

<pallas_src>
import functools

import jax
import jax.numpy as jnp
from jax.experimental import pallas as pl
from jax.experimental.pallas import tpu as pltpu

_LANE = 128     # vreg lane width (last dim)
_SUBLANE = 8    # f32 sublane count (second-to-last dim)


def _round_up(x: int, m: int) -> int:
    return ((x + m - 1) // m) * m


def _default_batch_tile(batch: int) -> int:
    """Multiple of 8 sublanes, >=2 grid steps when the batch allows, <=512 rows."""
    if batch <= _SUBLANE:
        return _SUBLANE
    half = max(_SUBLANE, (batch // 2) // _SUBLANE * _SUBLANE)
    return min(512, half)


def _mlp3_kernel(x_ref, w1_ref, b1_ref, w2_ref, b2_ref, w3_ref, b3_ref,
                 w4_ref, b4_ref, out_ref, *, output_probability: bool):
    """Whole MLP3 forward for one batch tile; weights stay VMEM-resident."""

    def layer(y, w_ref, b_ref, relu):
        # bf16 (or f32) operands on the MXU, f32 accumulation; bias + ReLU on the VPU.
        acc = jnp.dot(y.astype(w_ref.dtype), w_ref[...],
                      preferred_element_type=jnp.float32) + b_ref[...]
        return jnp.maximum(acc, 0.0) if relu else acc

    y = x_ref[...]
    y = layer(y, w1_ref, b1_ref, True)
    y = layer(y, w2_ref, b2_ref, True)
    y = layer(y, w3_ref, b3_ref, True)
    y = layer(y, w4_ref, b4_ref, False)
    if output_probability:
        y = jax.nn.sigmoid(y)            # EUP slot; padded columns sliced off outside.
    out_ref[...] = y.astype(out_ref.dtype)


def mlp3_forward(x, params, *, output_probability: bool = False,
                 batch_tile: int | None = None, compute_dtype=jnp.bfloat16):
    """MLP3 forward with a batch-tiled, lane-padded Pallas kernel.

    x:      (B, dim_in) float32.
    params: w{i}: (fan_in, fan_out) pre-transposed weights, b{i}: (1, fan_out), f32.
    """
    B, dim_in = x.shape
    dim_hid = params["w1"].shape[1]
    dim_out = params["w4"].shape[1]

    # ---- padded (lane-dense) geometry -------------------------------------
    din_p = _round_up(dim_in, _LANE)
    dh_p = _round_up(dim_hid, _LANE)
    dout_p = _round_up(dim_out, _LANE)

    if batch_tile is None:
        tb = _default_batch_tile(B)
    else:
        tb = _round_up(max(int(batch_tile), _SUBLANE), _SUBLANE)
    b_p = _round_up(B, tb)
    num_tiles = b_p // tb

    # ---- zero-pad & cast operands (zero padding keeps the math exact) -----
    def pad2(a, rows, cols, dtype):
        a = jnp.asarray(a)
        return jnp.pad(a, ((0, rows - a.shape[0]), (0, cols - a.shape[1]))).astype(dtype)

    x_p = pad2(x, b_p, din_p, compute_dtype)
    w1 = pad2(params["w1"], din_p, dh_p, compute_dtype)
    w2 = pad2(params["w2"], dh_p, dh_p, compute_dtype)
    w3 = pad2(params["w3"], dh_p, dh_p, compute_dtype)
    w4 = pad2(params["w4"], dh_p, dout_p, compute_dtype)
    b1 = pad2(params["b1"], 1, dh_p, jnp.float32)   # biases stay f32 (added to f32 acc)
    b2 = pad2(params["b2"], 1, dh_p, jnp.float32)
    b3 = pad2(params["b3"], 1, dh_p, jnp.float32)
    b4 = pad2(params["b4"], 1, dout_p, jnp.float32)

    # ---- explicit VMEM budget & cost estimate ------------------------------
    w_itemsize = jnp.dtype(compute_dtype).itemsize
    weight_bytes = (din_p * dh_p + 2 * dh_p * dh_p + dh_p * dout_p) * w_itemsize
    bias_bytes = (3 * dh_p + dout_p) * 4
    io_bytes = 2 * (tb * din_p * w_itemsize + tb * dout_p * 4)   # double-buffered x/out
    act_bytes = 3 * tb * dh_p * 4                                # f32 activation headroom
    vmem_needed = weight_bytes + bias_bytes + io_bytes + act_bytes
    vmem_limit = int(min(max(int(vmem_needed * 1.5), 32 * 1024 * 1024),
                         100 * 1024 * 1024))

    flops = 2 * b_p * (din_p * dh_p + 2 * dh_p * dh_p + dh_p * dout_p)
    cost = pl.CostEstimate(
        flops=flops,
        transcendentals=(b_p * dout_p) if output_probability else 0,
        bytes_accessed=int(b_p * din_p * w_itemsize + weight_bytes + bias_bytes
                           + b_p * dout_p * 4),
    )

    kernel = functools.partial(_mlp3_kernel, output_probability=output_probability)
    bcast = lambda i: (0, 0)

    def build(weight_buffers):
        if weight_buffers is None:
            wspec = lambda shape: pl.BlockSpec(shape, bcast)
        else:
            # Constant index_map -> the weight block never changes across the grid,
            # so a single buffer halves weight VMEM residency.
            wspec = lambda shape: pl.BlockSpec(
                shape, bcast, pipeline_mode=pl.Buffered(weight_buffers))
        in_specs = [
            pl.BlockSpec((tb, din_p), lambda i: (i, 0)),   # x tile (pipelined)
            wspec((din_p, dh_p)), wspec((1, dh_p)),        # w1, b1
            wspec((dh_p, dh_p)), wspec((1, dh_p)),         # w2, b2
            wspec((dh_p, dh_p)), wspec((1, dh_p)),         # w3, b3
            wspec((dh_p, dout_p)), wspec((1, dout_p)),     # w4, b4
        ]
        out_spec = pl.BlockSpec((tb, dout_p), lambda i: (i, 0))
        return pl.pallas_call(
            kernel,
            out_shape=jax.ShapeDtypeStruct((b_p, dout_p), jnp.float32),
            grid_spec=pltpu.PrefetchScalarGridSpec(
                num_scalar_prefetch=0,
                grid=(num_tiles,),
                in_specs=in_specs,
                out_specs=out_spec,
            ),
            compiler_params=pltpu.CompilerParams(
                dimension_semantics=("parallel",),
                vmem_limit_bytes=vmem_limit,
            ),
            cost_estimate=cost,
        )

    args = (x_p, w1, b1, w2, b2, w3, b3, w4, b4)
    try:
        out_p = jax.block_until_ready(build(1)(*args))
    except Exception:
        # Fallback for jax versions that reject single-buffered BlockSpecs
        # (pipeline_mode / pl.Buffered(1)): default double-buffered weights.
        out_p = jax.block_until_ready(build(None)(*args))
    return out_p[:B, :dim_out]


def init_mlp3_params(key, dim_in, dim_hid, dim_out):
    """nn.Linear-style init U(-1/sqrt(fan_in), 1/sqrt(fan_in)); weights stored (fan_in, fan_out)."""
    dims = [(dim_in, dim_hid), (dim_hid, dim_hid), (dim_hid, dim_hid), (dim_hid, dim_out)]
    params = {}
    for idx, (fi, fo) in enumerate(dims, start=1):
        key, kw, kb = jax.random.split(key, 3)
        bound = 1.0 / jnp.sqrt(jnp.float32(fi))
        params[f"w{idx}"] = jax.random.uniform(kw, (fi, fo), jnp.float32, -bound, bound)
        params[f"b{idx}"] = jax.random.uniform(kb, (1, fo), jnp.float32, -bound, bound)
    return params


def mlp3_reference(x, params, output_probability=False):
    """Pure-JAX f32 reference of the PyTorch forward."""
    y = x
    for i in (1, 2, 3):
        y = jnp.maximum(y @ params[f"w{i}"] + params[f"b{i}"], 0.0)
    y = y @ params["w4"] + params["b4"]
    if output_probability:
        y = jax.nn.sigmoid(y)
    return y


if __name__ == "__main__":
    key = jax.random.PRNGKey(0)
    kx, kp = jax.random.split(key)

    batch, dim_in, dim_hid, dim_out = 128, 16, 32, 4
    x = jax.random.normal(kx, (batch, dim_in), jnp.float32)
    params = init_mlp3_params(kp, dim_in, dim_hid, dim_out)

    ref = mlp3_reference(x, params, output_probability=False)
    ref_p = mlp3_reference(x, params, output_probability=True)

    # 1) Exact-structure check: f32 compute path must match the reference tightly.
    out_f32 = jax.block_until_ready(
        mlp3_forward(x, params, output_probability=False, compute_dtype=jnp.float32))
    assert out_f32.shape == (batch, dim_out)
    assert jnp.allclose(out_f32, ref, atol=1e-5, rtol=1e-5), "mismatch (f32 path)"

    # 2) Default bf16-MXU path (f32 accumulation): looser tolerance.
    out_bf16 = jax.block_until_ready(
        mlp3_forward(x, params, output_probability=False))
    assert out_bf16.shape == (batch, dim_out)
    assert jnp.allclose(out_bf16, ref, atol=1e-1, rtol=1e-1), "mismatch (bf16 path)"

    # 3) Sigmoid output path (bf16 compute).
    out_prob = jax.block_until_ready(
        mlp3_forward(x, params, output_probability=True))
    assert jnp.allclose(out_prob, ref_p, atol=5e-2), "mismatch (sigmoid path)"

    print("KERNEL_OK")
</pallas_src>

<mosaic_0001>
module attributes {stable_mosaic.version = 11 : i64} {
  func.func @_mlp3_kernel(%arg0: i32, %arg1: memref<64x128xf32, #tpu.memory_space<vmem>>, %arg2: memref<128x128xf32, #tpu.memory_space<vmem>>, %arg3: memref<1x128xf32, #tpu.memory_space<vmem>>, %arg4: memref<128x128xf32, #tpu.memory_space<vmem>>, %arg5: memref<1x128xf32, #tpu.memory_space<vmem>>, %arg6: memref<128x128xf32, #tpu.memory_space<vmem>>, %arg7: memref<1x128xf32, #tpu.memory_space<vmem>>, %arg8: memref<128x128xf32, #tpu.memory_space<vmem>>, %arg9: memref<1x128xf32, #tpu.memory_space<vmem>>, %arg10: memref<64x128xf32, #tpu.memory_space<vmem>>) attributes {dimension_semantics = [#tpu.dimension_semantics<parallel>], iteration_bounds = array<i64: 2>, scalar_prefetch = 0 : i64, scratch_operands = 0 : i64, tpu.core_type = #tpu.core_type<tc>, window_params = [{transform_indices = @transform_0, window_bounds = array<i64: 64, 128>}, {pipeline_mode = #tpu.pipeline_mode<synchronous>, transform_indices = @transform_1, window_bounds = array<i64: 128, 128>}, {pipeline_mode = #tpu.pipeline_mode<synchronous>, transform_indices = @transform_2, window_bounds = array<i64: 1, 128>}, {pipeline_mode = #tpu.pipeline_mode<synchronous>, transform_indices = @transform_3, window_bounds = array<i64: 128, 128>}, {pipeline_mode = #tpu.pipeline_mode<synchronous>, transform_indices = @transform_4, window_bounds = array<i64: 1, 128>}, {pipeline_mode = #tpu.pipeline_mode<synchronous>, transform_indices = @transform_5, window_bounds = array<i64: 128, 128>}, {pipeline_mode = #tpu.pipeline_mode<synchronous>, transform_indices = @transform_6, window_bounds = array<i64: 1, 128>}, {pipeline_mode = #tpu.pipeline_mode<synchronous>, transform_indices = @transform_7, window_bounds = array<i64: 128, 128>}, {pipeline_mode = #tpu.pipeline_mode<synchronous>, transform_indices = @transform_8, window_bounds = array<i64: 1, 128>}, {transform_indices = @transform_9, window_bounds = array<i64: 64, 128>}]} {
    %c0 = arith.constant 0 : index
    %c0_0 = arith.constant 0 : index
    %0 = vector.load %arg1[%c0, %c0_0] : memref<64x128xf32, #tpu.memory_space<vmem>>, vector<64x128xf32>
    %c0_1 = arith.constant 0 : index
    %c0_2 = arith.constant 0 : index
    %1 = vector.load %arg2[%c0_1, %c0_2] : memref<128x128xf32, #tpu.memory_space<vmem>>, vector<128x128xf32>
    %cst = arith.constant dense<0.000000e+00> : vector<64x128xf32>
    %2 = tpu.matmul %0, %1, %cst {dimension_numbers = #tpu.dot_dimension_numbers<[1], [0], [0], [1], [0, 0, 1, 1], [], []>} : vector<64x128xf32>, vector<128x128xf32>, vector<64x128xf32> -> vector<64x128xf32>
    %c0_3 = arith.constant 0 : index
    %c0_4 = arith.constant 0 : index
    %3 = vector.load %arg3[%c0_3, %c0_4] : memref<1x128xf32, #tpu.memory_space<vmem>>, vector<1x128xf32>
    %4 = vector.broadcast %3 : vector<1x128xf32> to vector<64x128xf32>
    %5 = arith.addf %2, %4 : vector<64x128xf32>
    %cst_5 = arith.constant 0.000000e+00 : f32
    %6 = vector.broadcast %cst_5 : f32 to vector<64x128xf32>
    %7 = arith.maximumf %5, %6 : vector<64x128xf32>
    %c0_6 = arith.constant 0 : index
    %c0_7 = arith.constant 0 : index
    %8 = vector.load %arg4[%c0_6, %c0_7] : memref<128x128xf32, #tpu.memory_space<vmem>>, vector<128x128xf32>
    %cst_8 = arith.constant dense<0.000000e+00> : vector<64x128xf32>
    %9 = tpu.matmul %7, %8, %cst_8 {dimension_numbers = #tpu.dot_dimension_numbers<[1], [0], [0], [1], [0, 0, 1, 1], [], []>} : vector<64x128xf32>, vector<128x128xf32>, vector<64x128xf32> -> vector<64x128xf32>
    %c0_9 = arith.constant 0 : index
    %c0_10 = arith.constant 0 : index
    %10 = vector.load %arg5[%c0_9, %c0_10] : memref<1x128xf32, #tpu.memory_space<vmem>>, vector<1x128xf32>
    %11 = vector.broadcast %10 : vector<1x128xf32> to vector<64x128xf32>
    %12 = arith.addf %9, %11 : vector<64x128xf32>
    %cst_11 = arith.constant 0.000000e+00 : f32
    %13 = vector.broadcast %cst_11 : f32 to vector<64x128xf32>
    %14 = arith.maximumf %12, %13 : vector<64x128xf32>
    %c0_12 = arith.constant 0 : index
    %c0_13 = arith.constant 0 : index
    %15 = vector.load %arg6[%c0_12, %c0_13] : memref<128x128xf32, #tpu.memory_space<vmem>>, vector<128x128xf32>
    %cst_14 = arith.constant dense<0.000000e+00> : vector<64x128xf32>
    %16 = tpu.matmul %14, %15, %cst_14 {dimension_numbers = #tpu.dot_dimension_numbers<[1], [0], [0], [1], [0, 0, 1, 1], [], []>} : vector<64x128xf32>, vector<128x128xf32>, vector<64x128xf32> -> vector<64x128xf32>
    %c0_15 = arith.constant 0 : index
    %c0_16 = arith.constant 0 : index
    %17 = vector.load %arg7[%c0_15, %c0_16] : memref<1x128xf32, #tpu.memory_space<vmem>>, vector<1x128xf32>
    %18 = vector.broadcast %17 : vector<1x128xf32> to vector<64x128xf32>
    %19 = arith.addf %16, %18 : vector<64x128xf32>
    %cst_17 = arith.constant 0.000000e+00 : f32
    %20 = vector.broadcast %cst_17 : f32 to vector<64x128xf32>
    %21 = arith.maximumf %19, %20 : vector<64x128xf32>
    %c0_18 = arith.constant 0 : index
    %c0_19 = arith.constant 0 : index
    %22 = vector.load %arg8[%c0_18, %c0_19] : memref<128x128xf32, #tpu.memory_space<vmem>>, vector<128x128xf32>
    %cst_20 = arith.constant dense<0.000000e+00> : vector<64x128xf32>
    %23 = tpu.matmul %21, %22, %cst_20 {dimension_numbers = #tpu.dot_dimension_numbers<[1], [0], [0], [1], [0, 0, 1, 1], [], []>} : vector<64x128xf32>, vector<128x128xf32>, vector<64x128xf32> -> vector<64x128xf32>
    %c0_21 = arith.constant 0 : index
    %c0_22 = arith.constant 0 : index
    %24 = vector.load %arg9[%c0_21, %c0_22] : memref<1x128xf32, #tpu.memory_space<vmem>>, vector<1x128xf32>
    %25 = vector.broadcast %24 : vector<1x128xf32> to vector<64x128xf32>
    %26 = arith.addf %23, %25 : vector<64x128xf32>
    %c0_23 = arith.constant 0 : index
    %c0_24 = arith.constant 0 : index
    %27 = vector.load %arg10[%c0_23, %c0_24] : memref<64x128xf32, #tpu.memory_space<vmem>>, vector<64x128xf32>
    tpu.vector_store %arg10[%c0_23, %c0_24], %26 {strides = array<i32>} : memref<64x128xf32, #tpu.memory_space<vmem>>, vector<64x128xf32>,
    return
  }
  func.func @transform_0(%arg0: i32) -> (i32, i32) {
    %c0_i32 = arith.constant 0 : i32
    %c0_i32_0 = arith.constant 0 : i32
    return %arg0, %c0_i32 : i32, i32
  }
  func.func @transform_1(%arg0: i32) -> (i32, i32) {
    %c0_i32 = arith.constant 0 : i32
    %c0_i32_0 = arith.constant 0 : i32
    %c0_i32_1 = arith.constant 0 : i32
    return %c0_i32, %c0_i32_0 : i32, i32
  }
  func.func @transform_2(%arg0: i32) -> (i32, i32) {
    %c0_i32 = arith.constant 0 : i32
    %c0_i32_0 = arith.constant 0 : i32
    %c0_i32_1 = arith.constant 0 : i32
    return %c0_i32, %c0_i32_0 : i32, i32
  }
  func.func @transform_3(%arg0: i32) -> (i32, i32) {
    %c0_i32 = arith.constant 0 : i32
    %c0_i32_0 = arith.constant 0 : i32
    %c0_i32_1 = arith.constant 0 : i32
    return %c0_i32, %c0_i32_0 : i32, i32
  }
  func.func @transform_4(%arg0: i32) -> (i32, i32) {
    %c0_i32 = arith.constant 0 : i32
    %c0_i32_0 = arith.constant 0 : i32
    %c0_i32_1 = arith.constant 0 : i32
    return %c0_i32, %c0_i32_0 : i32, i32
  }
  func.func @transform_5(%arg0: i32) -> (i32, i32) {
    %c0_i32 = arith.constant 0 : i32
    %c0_i32_0 = arith.constant 0 : i32
    %c0_i32_1 = arith.constant 0 : i32
    return %c0_i32, %c0_i32_0 : i32, i32
  }
  func.func @transform_6(%arg0: i32) -> (i32, i32) {
    %c0_i32 = arith.constant 0 : i32
    %c0_i32_0 = arith.constant 0 : i32
    %c0_i32_1 = arith.constant 0 : i32
    return %c0_i32, %c0_i32_0 : i32, i32
  }
  func.func @transform_7(%arg0: i32) -> (i32, i32) {
    %c0_i32 = arith.constant 0 : i32
    %c0_i32_0 = arith.constant 0 : i32
    %c0_i32_1 = arith.constant 0 : i32
    return %c0_i32, %c0_i32_0 : i32, i32
  }
  func.func @transform_8(%arg0: i32) -> (i32, i32) {
    %c0_i32 = arith.constant 0 : i32
    %c0_i32_0 = arith.constant 0 : i32
    %c0_i32_1 = arith.constant 0 : i32
    return %c0_i32, %c0_i32_0 : i32, i32
  }
  func.func @transform_9(%arg0: i32) -> (i32, i32) {
    %c0_i32 = arith.constant 0 : i32
    %c0_i32_0 = arith.constant 0 : i32
    return %arg0, %c0_i32 : i32, i32
  }
}

module attributes {stable_mosaic.version = 11 : i64} {
  func.func @_mlp3_kernel(%arg0: i32, %arg1: memref<64x128xf32, #tpu.memory_space<vmem>>, %arg2: memref<128x128xf32, #tpu.memory_space<vmem>>, %arg3: memref<1x128xf32, #tpu.memory_space<vmem>>, %arg4: memref<128x128xf32, #tpu.memory_space<vmem>>, %arg5: memref<1x128xf32, #tpu.memory_space<vmem>>, %arg6: memref<128x128xf32, #tpu.memory_space<vmem>>, %arg7: memref<1x128xf32, #tpu.memory_space<vmem>>, %arg8: memref<128x128xf32, #tpu.memory_space<vmem>>, %arg9: memref<1x128xf32, #tpu.memory_space<vmem>>, %arg10: memref<64x128xf32, #tpu.memory_space<vmem>>) attributes {dimension_semantics = [#tpu.dimension_semantics<parallel>], iteration_bounds = array<i64: 2>, scalar_prefetch = 0 : i64, scratch_operands = 0 : i64, tpu.core_type = #tpu.core_type<tc>, window_params = [{transform_indices = @transform_0, window_bounds = array<i64: 64, 128>}, {pipeline_mode = #tpu.pipeline_mode<synchronous>, transform_indices = @transform_1, window_bounds = array<i64: 128, 128>}, {pipeline_mode = #tpu.pipeline_mode<synchronous>, transform_indices = @transform_2, window_bounds = array<i64: 1, 128>}, {pipeline_mode = #tpu.pipeline_mode<synchronous>, transform_indices = @transform_3, window_bounds = array<i64: 128, 128>}, {pipeline_mode = #tpu.pipeline_mode<synchronous>, transform_indices = @transform_4, window_bounds = array<i64: 1, 128>}, {pipeline_mode = #tpu.pipeline_mode<synchronous>, transform_indices = @transform_5, window_bounds = array<i64: 128, 128>}, {pipeline_mode = #tpu.pipeline_mode<synchronous>, transform_indices = @transform_6, window_bounds = array<i64: 1, 128>}, {pipeline_mode = #tpu.pipeline_mode<synchronous>, transform_indices = @transform_7, window_bounds = array<i64: 128, 128>}, {pipeline_mode = #tpu.pipeline_mode<synchronous>, transform_indices = @transform_8, window_bounds = array<i64: 1, 128>}, {transform_indices = @transform_9, window_bounds = array<i64: 64, 128>}]} {
    %c0 = arith.constant 0 : index
    %c0_0 = arith.constant 0 : index
    %0 = vector.load %arg1[%c0, %c0_0] : memref<64x128xf32, #tpu.memory_space<vmem>>, vector<64x128xf32>
    %c0_1 = arith.constant 0 : index
    %c0_2 = arith.constant 0 : index
    %1 = vector.load %arg2[%c0_1, %c0_2] : memref<128x128xf32, #tpu.memory_space<vmem>>, vector<128x128xf32>
    %cst = arith.constant dense<0.000000e+00> : vector<64x128xf32>
    %2 = tpu.matmul %0, %1, %cst {dimension_numbers = #tpu.dot_dimension_numbers<[1], [0], [0], [1], [0, 0, 1, 1], [], []>} : vector<64x128xf32>, vector<128x128xf32>, vector<64x128xf32> -> vector<64x128xf32>
    %c0_3 = arith.constant 0 : index
    %c0_4 = arith.constant 0 : index
    %3 = vector.load %arg3[%c0_3, %c0_4] : memref<1x128xf32, #tpu.memory_space<vmem>>, vector<1x128xf32>
    %4 = vector.broadcast %3 : vector<1x128xf32> to vector<64x128xf32>
    %5 = arith.addf %2, %4 : vector<64x128xf32>
    %cst_5 = arith.constant 0.000000e+00 : f32
    %6 = vector.broadcast %cst_5 : f32 to vector<64x128xf32>
    %7 = arith.maximumf %5, %6 : vector<64x128xf32>
    %c0_6 = arith.constant 0 : index
    %c0_7 = arith.constant 0 : index
    %8 = vector.load %arg4[%c0_6, %c0_7] : memref<128x128xf32, #tpu.memory_space<vmem>>, vector<128x128xf32>
    %cst_8 = arith.constant dense<0.000000e+00> : vector<64x128xf32>
    %9 = tpu.matmul %7, %8, %cst_8 {dimension_numbers = #tpu.dot_dimension_numbers<[1], [0], [0], [1], [0, 0, 1, 1], [], []>} : vector<64x128xf32>, vector<128x128xf32>, vector<64x128xf32> -> vector<64x128xf32>
    %c0_9 = arith.constant 0 : index
    %c0_10 = arith.constant 0 : index
    %10 = vector.load %arg5[%c0_9, %c0_10] : memref<1x128xf32, #tpu.memory_space<vmem>>, vector<1x128xf32>
    %11 = vector.broadcast %10 : vector<1x128xf32> to vector<64x128xf32>
    %12 = arith.addf %9, %11 : vector<64x128xf32>
    %cst_11 = arith.constant 0.000000e+00 : f32
    %13 = vector.broadcast %cst_11 : f32 to vector<64x128xf32>
    %14 = arith.maximumf %12, %13 : vector<64x128xf32>
    %c0_12 = arith.constant 0 : index
    %c0_13 = arith.constant 0 : index
    %15 = vector.load %arg6[%c0_12, %c0_13] : memref<128x128xf32, #tpu.memory_space<vmem>>, vector<128x128xf32>
    %cst_14 = arith.constant dense<0.000000e+00> : vector<64x128xf32>
    %16 = tpu.matmul %14, %15, %cst_14 {dimension_numbers = #tpu.dot_dimension_numbers<[1], [0], [0], [1], [0, 0, 1, 1], [], []>} : vector<64x128xf32>, vector<128x128xf32>, vector<64x128xf32> -> vector<64x128xf32>
    %c0_15 = arith.constant 0 : index
    %c0_16 = arith.constant 0 : index
    %17 = vector.load %arg7[%c0_15, %c0_16] : memref<1x128xf32, #tpu.memory_space<vmem>>, vector<1x128xf32>
    %18 = vector.broadcast %17 : vector<1x128xf32> to vector<64x128xf32>
    %19 = arith.addf %16, %18 : vector<64x128xf32>
    %cst_17 = arith.constant 0.000000e+00 : f32
    %20 = vector.broadcast %cst_17 : f32 to vector<64x128xf32>
    %21 = arith.maximumf %19, %20 : vector<64x128xf32>
    %c0_18 = arith.constant 0 : index
    %c0_19 = arith.constant 0 : index
    %22 = vector.load %arg8[%c0_18, %c0_19] : memref<128x128xf32, #tpu.memory_space<vmem>>, vector<128x128xf32>
    %cst_20 = arith.constant dense<0.000000e+00> : vector<64x128xf32>
    %23 = tpu.matmul %21, %22, %cst_20 {dimension_numbers = #tpu.dot_dimension_numbers<[1], [0], [0], [1], [0, 0, 1, 1], [], []>} : vector<64x128xf32>, vector<128x128xf32>, vector<64x128xf32> -> vector<64x128xf32>
    %c0_21 = arith.constant 0 : index
    %c0_22 = arith.constant 0 : index
    %24 = vector.load %arg9[%c0_21, %c0_22] : memref<1x128xf32, #tpu.memory_space<vmem>>, vector<1x128xf32>
    %25 = vector.broadcast %24 : vector<1x128xf32> to vector<64x128xf32>
    %26 = arith.addf %23, %25 : vector<64x128xf32>
    %c0_23 = arith.constant 0 : index
    %c0_24 = arith.constant 0 : index
    %27 = vector.load %arg10[%c0_23, %c0_24] : memref<64x128xf32, #tpu.memory_space<vmem>>, vector<64x128xf32>
    tpu.vector_store %arg10[%c0_23, %c0_24], %26 {strides = array<i32>} : memref<64x128xf32, #tpu.memory_space<vmem>>, vector<64x128xf32>,
    return
  }
  func.func @transform_0(%arg0: i32) -> (i32, i32) {
    %c0_i32 = arith.constant 0 : i32
    %c0_i32_0 = arith.constant 0 : i32
    return %arg0, %c0_i32 : i32, i32
  }
  func.func @transform_1(%arg0: i32) -> (i32, i32) {
    %c0_i32 = arith.constant 0 : i32
    %c0_i32_0 = arith.constant 0 : i32
    %c0_i32_1 = arith.constant 0 : i32
    return %c0_i32, %c0_i32_0 : i32, i32
  }
  func.func @transform_2(%arg0: i32) -> (i32, i32) {
    %c0_i32 = arith.constant 0 : i32
    %c0_i32_0 = arith.constant 0 : i32
    %c0_i32_1 = arith.constant 0 : i32
    return %c0_i32, %c0_i32_0 : i32, i32
  }
  func.func @transform_3(%arg0: i32) -> (i32, i32) {
    %c0_i32 = arith.constant 0 : i32
    %c0_i32_0 = arith.constant 0 : i32
    %c0_i32_1 = arith.constant 0 : i32
    return %c0_i32, %c0_i32_0 : i32, i32
  }
  func.func @transform_4(%arg0: i32) -> (i32, i32) {
    %c0_i32 = arith.constant 0 : i32
    %c0_i32_0 = arith.constant 0 : i32
    %c0_i32_1 = arith.constant 0 : i32
    return %c0_i32, %c0_i32_0 : i32, i32
  }
  func.func @transform_5(%arg0: i32) -> (i32, i32) {
    %c0_i32 = arith.constant 0 : i32
    %c0_i32_0 = arith.constant 0 : i32
    %c0_i32_1 = arith.constant 0 : i32
    return %c0_i32, %c0_i32_0 : i32, i32
  }
  func.func @transform_6(%arg0: i32) -> (i32, i32) {
    %c0_i32 = arith.constant 0 : i32
    %c0_i32_0 = arith.constant 0 : i32
    %c0_i32_1 = arith.constant 0 : i32
    return %c0_i32, %c0_i32_0 : i32, i32
  }
  func.func @transform_7(%arg0: i32) -> (i32, i32) {
    %c0_i32 = arith.constant 0 : i32
    %c0_i32_0 = arith.constant 0 : i32
    %c0_i32_1 = arith.constant 0 : i32
    return %c0_i32, %c0_i32_0 : i32, i32
  }
  func.func @transform_8(%arg0: i32) -> (i32, i32) {
    %c0_i32 = arith.constant 0 : i32
    %c0_i32_0 = arith.constant 0 : i32
    %c0_i32_1 = arith.constant 0 : i32
    return %c0_i32, %c0_i32_0 : i32, i32
  }
  func.func @transform_9(%arg0: i32) -> (i32, i32) {
    %c0_i32 = arith.constant 0 : i32
    %c0_i32_0 = arith.constant 0 : i32
    return %arg0, %c0_i32 : i32, i32
  }
}

</mosaic_0001>

<llo_original>
// kernel: tpu_custom_call.1
$region0: #{tpu_custom_call.1}
  #allocation0 [shape = 'u32[]', space=smem, size = 0x4, offset = 0x4, fixed_abs, tag = 'smem constant byte address 0x4 - core index']
  #allocation1 [shape = 'u32[144,128]{1,0:T(1,128)}', space=vmem, size = 0x12000, scoped, tag = 'internal scratch']
  %s0 = inlined_call_operand.hbm [shape: f32[128,128], index: 0, kind: input, shape index: {}]
  %s1 = inlined_call_operand.hbm [shape: f32[128,128], index: 1, kind: input, shape index: {}]
  %s2 = inlined_call_operand.vmem [shape: f32[1,128], index: 2, kind: input, shape index: {}]
  %s3 = inlined_call_operand.hbm [shape: f32[128,128], index: 3, kind: input, shape index: {}]
  %s4 = inlined_call_operand.vmem [shape: f32[1,128], index: 4, kind: input, shape index: {}]
  %s5 = inlined_call_operand.hbm [shape: f32[128,128], index: 5, kind: input, shape index: {}]
  %s6 = inlined_call_operand.vmem [shape: f32[1,128], index: 6, kind: input, shape index: {}]
  %s7 = inlined_call_operand.hbm [shape: f32[128,128], index: 7, kind: input, shape index: {}]
  %s8 = inlined_call_operand.vmem [shape: f32[1,128], index: 8, kind: input, shape index: {}]
  %s9 = inlined_call_operand.hbm [shape: f32[128,128], index: 9, kind: output, shape index: {}]
  %s10 = sld [smem:[#allocation0]]
  $region89: #{tpu_custom_call.1} parent=0
    _
  %s12 = ssub.s32 1, %s10
  %s13 = scalar_select 0, %s12, %s10
  $region1: #{tpu_custom_call.1} parent=0
    #allocation2 [shape = 'u8[65536]{0}', space=vmem, size = 0x10000, scoped, tag = 'input window, operand 0']
    #allocation3 [shape = 's32[2]{0}', space=sflag, size = 0x8, scoped, tag = 'scoped memory for tpu_custom_call.1']
    #allocation4 [shape = 's32[2]{0}', space=sflag, size = 0x8, scoped, tag = 'scoped memory for tpu_custom_call.1']
    #allocation5 [shape = 'u8[65536]{0}', space=vmem, size = 0x10000, scoped, tag = 'input window, operand 1, single buffered']
    #allocation6 [shape = 's32[1]{0}', space=sflag, size = 0x4, scoped, tag = 'scoped memory for tpu_custom_call.1']
    #allocation7 [shape = 'u8[65536]{0}', space=vmem, size = 0x10000, scoped, tag = 'input window, operand 3, single buffered']
    #allocation8 [shape = 'u8[65536]{0}', space=vmem, size = 0x10000, scoped, tag = 'input window, operand 5, single buffered']
    #allocation9 [shape = 's32[1]{0}', space=sflag, size = 0x4, scoped, tag = 'scoped memory for tpu_custom_call.1']
    #allocation10 [shape = 'u8[65536]{0}', space=vmem, size = 0x10000, scoped, tag = 'input window, operand 7, single buffered']
    #allocation11 [shape = 'u8[65536]{0}', space=vmem, size = 0x10000, scoped, tag = 'output window, operand 0']
    %14 = vsyncpa [#allocation3], 0
    %s15 = scalar_lea.sflag [#allocation3], 1
    %16 = vsyncpa %s15, 0
    %17 = vsyncpa [#allocation6], 0
    %18 = vsyncpa [#allocation9], 0
    %19 = vsyncpa [#allocation4], 0
    %s20 = scalar_lea.sflag [#allocation4], 1
    %21 = vsyncpa %s20, 0
    loop: start=0, step=1, limit=4
    $region2: #{tpu_custom_call.1} parent=1 // loop_pre_header
      _
    $region3: #{tpu_custom_call.1} parent=1 // loop_header
      %s23 = sphi 0, %s27
      %p24 = scmp.ge.s32.totalorder %s23, 4
      %s33 = sphi 0, %s35
      %s36 = sphi 0, %s33
      %s37 = sphi 0, %s36
      %s53 = sphi 0, %s37
      %s57 = sphi 0, %s57
      %s59 = sphi 0, %s57
      %s60 = sphi 0, %s59
      %s74 = sphi 0, %s60
      %s78 = sphi 0, %s78
      %s80 = sphi 0, %s78
      %s81 = sphi 0, %s80
      %s95 = sphi 0, %s81
      %s99 = sphi 0, %s99
      %s101 = sphi 0, %s99
      %s102 = sphi 0, %s101
      %s116 = sphi 0, %s102
      %s120 = sphi 0, %s120
      %s122 = sphi 0, %s120
      %s123 = sphi 0, %s122
      %s137 = sphi 0, %s123
      %s141 = sphi 0, %s141
      %s143 = sphi 0, %s141
      %s144 = sphi 0, %s143
      %s158 = sphi 0, %s144
      %s162 = sphi 0, %s162
      %s164 = sphi 0, %s162
      %s165 = sphi 0, %s164
      %s179 = sphi 0, %s165
      %s183 = sphi 0, %s183
      %s185 = sphi 0, %s183
      %s186 = sphi 0, %s185
      %s200 = sphi 0, %s186
      %s204 = sphi 0, %s204
      %s206 = sphi 0, %s204
      %s207 = sphi 0, %s206
      %s221 = sphi 0, %s207
      %s227 = sphi 0, %s229
      %s230 = sphi 0, %s227
      %s231 = sphi 0, %s230
      %s247 = sphi 0, %s231
    $region4: #{tpu_custom_call.1} parent=1 // loop_header_branch
      %26 = sbr.rel (%p24) target = $region8
    $region5: #{tpu_custom_call.1} parent=1 // loop_body
      %s28 = ssub.s32 %s23, 1
      %s29 = ssub.s32 %s23, 2
      %s30 = sadd.s32 %s23, 1
      %s31 = ssub.s32 %s23, %s30
      %p32 = scmp.eq.s32.totalorder %s31, 0
      %s34 = sadd.s32 %s33, 1
      %s35 = scalar_select %p32, %s33, %s34
      %p38 = pneg %p32
      %p39 = scmp.eq.s32.totalorder %s23, 1
      %p40 = por %p38, %p39
      %p41 = scmp.ne.s32.totalorder %s33, %s36
      %p42 = scmp.eq.s32.totalorder %s23, 0
      %p43 = por %p41, %p42
      %p44 = scmp.ne.s32.totalorder %s33, %s36
      %p45 = scmp.eq.s32.totalorder %s28, 1
      %p46 = por %p44, %p45
      %p47 = scmp.ne.s32.totalorder %s36, %s37
      %p48 = scmp.eq.s32.totalorder %s28, 0
      %p49 = por %p47, %p48
      %p50 = scmp.ne.s32.totalorder %s36, %s37
      %p51 = scmp.eq.s32.totalorder %s29, 1
      %p52 = por %p50, %p51
      %p54 = scmp.ne.s32.totalorder %s37, %s53
      %p55 = scmp.eq.s32.totalorder %s29, 0
      %p56 = por %p54, %p55
      %s58 = sadd.s32 %s57, 1
      %p61 = scmp.eq.s32.totalorder %s23, 1
      %p62 = scmp.ne.s32.totalorder %s57, %s59
      %p63 = scmp.eq.s32.totalorder %s23, 0
      %p64 = por %p62, %p63
      %p65 = scmp.ne.s32.totalorder %s57, %s59
      %p66 = scmp.eq.s32.totalorder %s28, 1
      %p67 = por %p65, %p66
      %p68 = scmp.ne.s32.totalorder %s59, %s60
      %p69 = scmp.eq.s32.totalorder %s28, 0
      %p70 = por %p68, %p69
      %p71 = scmp.ne.s32.totalorder %s59, %s60
      %p72 = scmp.eq.s32.totalorder %s29, 1
      %p73 = por %p71, %p72
      %p75 = scmp.ne.s32.totalorder %s60, %s74
      %p76 = scmp.eq.s32.totalorder %s29, 0
      %p77 = por %p75, %p76
      %s79 = sadd.s32 %s78, 1
      %p82 = scmp.eq.s32.totalorder %s23, 1
      %p83 = scmp.ne.s32.totalorder %s78, %s80
      %p84 = scmp.eq.s32.totalorder %s23, 0
      %p85 = por %p83, %p84
      %p86 = scmp.ne.s32.totalorder %s78, %s80
      %p87 = scmp.eq.s32.totalorder %s28, 1
      %p88 = por %p86, %p87
      %p89 = scmp.ne.s32.totalorder %s80, %s81
      %p90 = scmp.eq.s32.totalorder %s28, 0
      %p91 = por %p89, %p90
      %p92 = scmp.ne.s32.totalorder %s80, %s81
      %p93 = scmp.eq.s32.totalorder %s29, 1
      %p94 = por %p92, %p93
      %p96 = scmp.ne.s32.totalorder %s81, %s95
      %p97 = scmp.eq.s32.totalorder %s29, 0
      %p98 = por %p96, %p97
      %s100 = sadd.s32 %s99, 1
      %p103 = scmp.eq.s32.totalorder %s23, 1
      %p104 = scmp.ne.s32.totalorder %s99, %s101
      %p105 = scmp.eq.s32.totalorder %s23, 0
      %p106 = por %p104, %p105
      %p107 = scmp.ne.s32.totalorder %s99, %s101
      %p108 = scmp.eq.s32.totalorder %s28, 1
      %p109 = por %p107, %p108
      %p110 = scmp.ne.s32.totalorder %s101, %s102
      %p111 = scmp.eq.s32.totalorder %s28, 0
      %p112 = por %p110, %p111
      %p113 = scmp.ne.s32.totalorder %s101, %s102
      %p114 = scmp.eq.s32.totalorder %s29, 1
      %p115 = por %p113, %p114
      %p117 = scmp.ne.s32.totalorder %s102, %s116
      %p118 = scmp.eq.s32.totalorder %s29, 0
      %p119 = por %p117, %p118
      %s121 = sadd.s32 %s120, 1
      %p124 = scmp.eq.s32.totalorder %s23, 1
      %p125 = scmp.ne.s32.totalorder %s120, %s122
      %p126 = scmp.eq.s32.totalorder %s23, 0
      %p127 = por %p125, %p126
      %p128 = scmp.ne.s32.totalorder %s120, %s122
      %p129 = scmp.eq.s32.totalorder %s28, 1
      %p130 = por %p128, %p129
      %p131 = scmp.ne.s32.totalorder %s122, %s123
      %p132 = scmp.eq.s32.totalorder %s28, 0
      %p133 = por %p131, %p132
      %p134 = scmp.ne.s32.totalorder %s122, %s123
      %p135 = scmp.eq.s32.totalorder %s29, 1
      %p136 = por %p134, %p135
      %p138 = scmp.ne.s32.totalorder %s123, %s137
      %p139 = scmp.eq.s32.totalorder %s29, 0
      %p140 = por %p138, %p139
      %s142 = sadd.s32 %s141, 1
      %p145 = scmp.eq.s32.totalorder %s23, 1
      %p146 = scmp.ne.s32.totalorder %s141, %s143
      %p147 = scmp.eq.s32.totalorder %s23, 0
      %p148 = por %p146, %p147
      %p149 = scmp.ne.s32.totalorder %s141, %s143
      %p150 = scmp.eq.s32.totalorder %s28, 1
      %p151 = por %p149, %p150
      %p152 = scmp.ne.s32.totalorder %s143, %s144
      %p153 = scmp.eq.s32.totalorder %s28, 0
      %p154 = por %p152, %p153
      %p155 = scmp.ne.s32.totalorder %s143, %s144
      %p156 = scmp.eq.s32.totalorder %s29, 1
      %p157 = por %p155, %p156
      %p159 = scmp.ne.s32.totalorder %s144, %s158
      %p160 = scmp.eq.s32.totalorder %s29, 0
      %p161 = por %p159, %p160
      %s163 = sadd.s32 %s162, 1
      %p166 = scmp.eq.s32.totalorder %s23, 1
      %p167 = scmp.ne.s32.totalorder %s162, %s164
      %p168 = scmp.eq.s32.totalorder %s23, 0
      %p169 = por %p167, %p168
      %p170 = scmp.ne.s32.totalorder %s162, %s164
      %p171 = scmp.eq.s32.totalorder %s28, 1
      %p172 = por %p170, %p171
      %p173 = scmp.ne.s32.totalorder %s164, %s165
      %p174 = scmp.eq.s32.totalorder %s28, 0
      %p175 = por %p173, %p174
      %p176 = scmp.ne.s32.totalorder %s164, %s165
      %p177 = scmp.eq.s32.totalorder %s29, 1
      %p178 = por %p176, %p177
      %p180 = scmp.ne.s32.totalorder %s165, %s179
      %p181 = scmp.eq.s32.totalorder %s29, 0
      %p182 = por %p180, %p181
      %s184 = sadd.s32 %s183, 1
      %p187 = scmp.eq.s32.totalorder %s23, 1
      %p188 = scmp.ne.s32.totalorder %s183, %s185
      %p189 = scmp.eq.s32.totalorder %s23, 0
      %p190 = por %p188, %p189
      %p191 = scmp.ne.s32.totalorder %s183, %s185
      %p192 = scmp.eq.s32.totalorder %s28, 1
      %p193 = por %p191, %p192
      %p194 = scmp.ne.s32.totalorder %s185, %s186
      %p195 = scmp.eq.s32.totalorder %s28, 0
      %p196 = por %p194, %p195
      %p197 = scmp.ne.s32.totalorder %s185, %s186
      %p198 = scmp.eq.s32.totalorder %s29, 1
      %p199 = por %p197, %p198
      %p201 = scmp.ne.s32.totalorder %s186, %s200
      %p202 = scmp.eq.s32.totalorder %s29, 0
      %p203 = por %p201, %p202
      %s205 = sadd.s32 %s204, 1
      %p208 = scmp.eq.s32.totalorder %s23, 1
      %p209 = scmp.ne.s32.totalorder %s204, %s206
      %p210 = scmp.eq.s32.totalorder %s23, 0
      %p211 = por %p209, %p210
      %p212 = scmp.ne.s32.totalorder %s204, %s206
      %p213 = scmp.eq.s32.totalorder %s28, 1
      %p214 = por %p212, %p213
      %p215 = scmp.ne.s32.totalorder %s206, %s207
      %p216 = scmp.eq.s32.totalorder %s28, 0
      %p217 = por %p215, %p216
      %p218 = scmp.ne.s32.totalorder %s206, %s207
      %p219 = scmp.eq.s32.totalorder %s29, 1
      %p220 = por %p218, %p219
      %p222 = scmp.ne.s32.totalorder %s207, %s221
      %p223 = scmp.eq.s32.totalorder %s29, 0
      %p224 = por %p222, %p223
      %s225 = ssub.s32 %s23, %s30
      %p226 = scmp.eq.s32.totalorder %s225, 0
      %s228 = sadd.s32 %s227, 1
      %s229 = scalar_select %p226, %s227, %s228
      %p232 = pneg %p226
      %p233 = scmp.eq.s32.totalorder %s23, 1
      %p234 = por %p232, %p233
      %p235 = scmp.ne.s32.totalorder %s227, %s230
      %p236 = scmp.eq.s32.totalorder %s23, 0
      %p237 = por %p235, %p236
      %p238 = scmp.ne.s32.totalorder %s227, %s230
      %p239 = scmp.eq.s32.totalorder %s28, 1
      %p240 = por %p238, %p239
      %p241 = scmp.ne.s32.totalorder %s230, %s231
      %p242 = scmp.eq.s32.totalorder %s28, 0
      %p243 = por %p241, %p242
      %p244 = scmp.ne.s32.totalorder %s230, %s231
      %p245 = scmp.eq.s32.totalorder %s29, 1
      %p246 = por %p244, %p245
      %p248 = scmp.ne.s32.totalorder %s231, %s247
      %p249 = scmp.eq.s32.totalorder %s29, 0
      %p250 = por %p248, %p249
      %p251 = scmp.le.s32.totalorder 1, %s23
      %p252 = scmp.lt.s32.totalorder %s23, 3
      %p253 = pnand %p251, %p252
      %p254 = pneg %p253
      // Predicated region
      $region9: #{tpu_custom_call.1} parent=5 // pred_check
        _
      $region10: #{tpu_custom_call.1} parent=5 // pred_check_branch
        %256 = sbr.rel (%p253) target = $region12
      $region11: #{tpu_custom_call.1} parent=5 // pred_region
        %s257 = ssub.s32 %s23, 1
        // Predicated region
        $region13: #{tpu_custom_call.1} parent=11 // pred_check
          %p258 = pneg %p70
        $region14: #{tpu_custom_call.1} parent=11 // pred_check_branch
          %260 = sbr.rel (%p258) target = $region16
        $region15: #{tpu_custom_call.1} parent=11 // pred_region
          %s262 = ssub.s32 2048, 2048
          %263 = vsyncadd [#allocation6], %s262
          %s264 = sshll.u32 [#allocation5], 4
          %s265 = int_to_ptr.vmem [resolvable:$true] %s264
          %270 = dma.hbm_to_vmem [thread:$0]  %s1, 2048, %s265, [#allocation6], 128, 128, 8
        $region16: #{tpu_custom_call.1} parent=11 // pred_fallthru
          _
        // Predicated region
        $region17: #{tpu_custom_call.1} parent=11 // pred_check
          %p271 = pneg %p91
        $region18: #{tpu_custom_call.1} parent=11 // pred_check_branch
          %273 = sbr.rel (%p271) target = $region20
        $region19: #{tpu_custom_call.1} parent=11 // pred_region
          _
        $region20: #{tpu_custom_call.1} parent=11 // pred_fallthru
          _
        // Predicated region
        $region21: #{tpu_custom_call.1} parent=11 // pred_check
          %p274 = pneg %p112
        $region22: #{tpu_custom_call.1} parent=11 // pred_check_branch
          %276 = sbr.rel (%p274) target = $region24
        $region23: #{tpu_custom_call.1} parent=11 // pred_region
          %s278 = ssub.s32 2048, 2048
          %279 = vsyncadd [#allocation6], %s278
          %s280 = sshll.u32 [#allocation7], 4
          %s281 = int_to_ptr.vmem [resolvable:$true] %s280
          %286 = dma.hbm_to_vmem [thread:$0]  %s3, 2048, %s281, [#allocation6], 128, 128, 8
        $region24: #{tpu_custom_call.1} parent=11 // pred_fallthru
          _
        // Predicated region
        $region25: #{tpu_custom_call.1} parent=11 // pred_check
          %p287 = pneg %p133
        $region26: #{tpu_custom_call.1} parent=11 // pred_check_branch
          %289 = sbr.rel (%p287) target = $region28
        $region27: #{tpu_custom_call.1} parent=11 // pred_region
          _
        $region28: #{tpu_custom_call.1} parent=11 // pred_fallthru
          _
        // Predicated region
        $region29: #{tpu_custom_call.1} parent=11 // pred_check
          %p290 = pneg %p154
        $region30: #{tpu_custom_call.1} parent=11 // pred_check_branch
          %292 = sbr.rel (%p290) target = $region32
        $region31: #{tpu_custom_call.1} parent=11 // pred_region
          %s294 = ssub.s32 2048, 2048
          %295 = vsyncadd [#allocation9], %s294
          %s296 = sshll.u32 [#allocation8], 4
          %s297 = int_to_ptr.vmem [resolvable:$true] %s296
          %302 = dma.hbm_to_vmem [thread:$0]  %s5, 2048, %s297, [#allocation9], 128, 128, 8
        $region32: #{tpu_custom_call.1} parent=11 // pred_fallthru
          _
        // Predicated region
        $region33: #{tpu_custom_call.1} parent=11 // pred_check
          %p303 = pneg %p175
        $region34: #{tpu_custom_call.1} parent=11 // pred_check_branch
          %305 = sbr.rel (%p303) target = $region36
        $region35: #{tpu_custom_call.1} parent=11 // pred_region
          _
        $region36: #{tpu_custom_call.1} parent=11 // pred_fallthru
          _
        // Predicated region
        $region37: #{tpu_custom_call.1} parent=11 // pred_check
          %p306 = pneg %p196
        $region38: #{tpu_custom_call.1} parent=11 // pred_check_branch
          %308 = sbr.rel (%p306) target = $region40
        $region39: #{tpu_custom_call.1} parent=11 // pred_region
          %s310 = ssub.s32 2048, 2048
          %311 = vsyncadd [#allocation9], %s310
          %s312 = sshll.u32 [#allocation10], 4
          %s313 = int_to_ptr.vmem [resolvable:$true] %s312
          %318 = dma.hbm_to_vmem [thread:$0]  %s7, 2048, %s313, [#allocation9], 128, 128, 8
        $region40: #{tpu_custom_call.1} parent=11 // pred_fallthru
          _
        // Predicated region
        $region41: #{tpu_custom_call.1} parent=11 // pred_check
          %p319 = pneg %p217
        $region42: #{tpu_custom_call.1} parent=11 // pred_check_branch
          %321 = sbr.rel (%p319) target = $region44
        $region43: #{tpu_custom_call.1} parent=11 // pred_region
          _
        $region44: #{tpu_custom_call.1} parent=11 // pred_fallthru
          _
      $region12: #{tpu_custom_call.1} parent=5 // pred_fallthru
        _
      %p322 = scmp.lt.s32.totalorder %s23, 2
      // Predicated region
      $region45: #{tpu_custom_call.1} parent=5 // pred_check
        %p323 = pneg %p322
      $region46: #{tpu_custom_call.1} parent=5 // pred_check_branch
        %325 = sbr.rel (%p323) target = $region48
      $region47: #{tpu_custom_call.1} parent=5 // pred_region
        // Predicated region
        $region49: #{tpu_custom_call.1} parent=47 // pred_check
          %p326 = pneg %p43
        $region50: #{tpu_custom_call.1} parent=47 // pred_check_branch
          %328 = sbr.rel (%p326) target = $region52
        $region51: #{tpu_custom_call.1} parent=47 // pred_region
          %s329 = sand.u32 %s33, 1
          %s330 = scalar_lea.sflag [#allocation3], %s329
          %s331 = sand.u32 %s33, 1
          %s332 = smul.addr %s331, 64
          %s333 = scalar_lea.vmem [#allocation2], %s332
          %s334 = smul.u32 8, %s23
          %s336 = ssub.s32 1024, 1024
          %337 = vsyncadd %s330, %s336
          %s338 = smul.addr %s334, 128
          %s339 = scalar_lea.hbm %s0, %s338
          %s340 = sshll.u32 %s333, 4
          %s341 = int_to_ptr.vmem [resolvable:$true] %s340
          %346 = dma.hbm_to_vmem [thread:$0]  %s339, 1024, %s341, %s330, 128, 128, 8
        $region52: #{tpu_custom_call.1} parent=47 // pred_fallthru
          _
      $region48: #{tpu_custom_call.1} parent=5 // pred_fallthru
        _
      %p347 = scmp.le.s32.totalorder 1, %s23
      %p348 = scmp.lt.s32.totalorder %s23, 3
      %p349 = pnand %p347, %p348
      %p350 = pneg %p349
      // Predicated region
      $region53: #{tpu_custom_call.1} parent=5 // pred_check
        _
      $region54: #{tpu_custom_call.1} parent=5 // pred_check_branch
        %352 = sbr.rel (%p349) target = $region56
      $region55: #{tpu_custom_call.1} parent=5 // pred_region
        %s353 = ssub.s32 %s23, 1
        %s354 = sand.u32 %s36, 1
        %s355 = scalar_lea.sflag [#allocation3], %s354
        %s356 = sand.u32 %s36, 1
        %s357 = smul.addr %s356, 64
        %s358 = scalar_lea.vmem [#allocation2], %s357
        // Predicated region
        $region57: #{tpu_custom_call.1} parent=55 // pred_check
          %p359 = pneg %p49
        $region58: #{tpu_custom_call.1} parent=55 // pred_check_branch
          %361 = sbr.rel (%p359) target = $region60
        $region59: #{tpu_custom_call.1} parent=55 // pred_region
          %362 = dma.done %s355, 1024
        $region60: #{tpu_custom_call.1} parent=55 // pred_fallthru
          _
        // Predicated region
        $region61: #{tpu_custom_call.1} parent=55 // pred_check
          %p363 = pneg %p70
        $region62: #{tpu_custom_call.1} parent=55 // pred_check_branch
          %365 = sbr.rel (%p363) target = $region64
        $region63: #{tpu_custom_call.1} parent=55 // pred_region
          %366 = dma.done [#allocation6], 2048
        $region64: #{tpu_custom_call.1} parent=55 // pred_fallthru
          _
        // Predicated region
        $region65: #{tpu_custom_call.1} parent=55 // pred_check
          %p367 = pneg %p112
        $region66: #{tpu_custom_call.1} parent=55 // pred_check_branch
          %369 = sbr.rel (%p367) target = $region68
        $region67: #{tpu_custom_call.1} parent=55 // pred_region
          %370 = dma.done [#allocation6], 2048
        $region68: #{tpu_custom_call.1} parent=55 // pred_fallthru
          _
        // Predicated region
        $region69: #{tpu_custom_call.1} parent=55 // pred_check
          %p371 = pneg %p154
        $region70: #{tpu_custom_call.1} parent=55 // pred_check_branch
          %373 = sbr.rel (%p371) target = $region72
        $region71: #{tpu_custom_call.1} parent=55 // pred_region
          %374 = dma.done [#allocation9], 2048
        $region72: #{tpu_custom_call.1} parent=55 // pred_fallthru
          _
        // Predicated region
        $region73: #{tpu_custom_call.1} parent=55 // pred_check
          %p375 = pneg %p196
        $region74: #{tpu_custom_call.1} parent=55 // pred_check_branch
          %377 = sbr.rel (%p375) target = $region76
        $region75: #{tpu_custom_call.1} parent=55 // pred_region
          %378 = dma.done [#allocation9], 2048
        $region76: #{tpu_custom_call.1} parent=55 // pred_fallthru
          _
        %s379 = sand.u32 %s36, 1
        %s380 = scalar_lea.sflag [#allocation3], %s379
        %s381 = sand.u32 %s36, 1
        %s382 = smul.addr %s381, 64
        %s383 = scalar_lea.vmem [#allocation2], %s382
        %p384 = pneg %p49
        %p385 = pneg %p46
        %p386 = pneg %p70
        %p387 = pneg %p67
        %p388 = pneg %p91
        %p389 = pneg %p88
        %p390 = pneg %p112
        %p391 = pneg %p109
        %p392 = pneg %p133
        %p393 = pneg %p130
        %p394 = pneg %p154
        %p395 = pneg %p151
        %p396 = pneg %p175
        %p397 = pneg %p172
        %p398 = pneg %p196
        %p399 = pneg %p193
        %p400 = pneg %p217
        %p401 = pneg %p214
        %p402 = pneg %p243
        %p403 = pneg %p240
        %s404 = sand.u32 %s230, 1
        %s405 = scalar_lea.sflag [#allocation4], %s404
        %s406 = sand.u32 %s230, 1
        %s407 = smul.addr %s406, 64
        %s408 = scalar_lea.vmem [#allocation11], %s407
        %s409 = smul.u32 8, %s28
        %s410 = smul.u32 8, %s28
        %v411 = vld [vmem:[%s358] sm:$0xff]
        %v412 = vld [vmem:[%s358 + $0x8] sm:$0xff]
        %v413 = vld [vmem:[%s358 + $0x10] sm:$0xff]
        %v414 = vld [vmem:[%s358 + $0x18] sm:$0xff]
        %v415 = vld [vmem:[%s358 + $0x20] sm:$0xff]
        %v416 = vld [vmem:[%s358 + $0x28] sm:$0xff]
        %v417 = vld [vmem:[%s358 + $0x30] sm:$0xff]
        %v418 = vld [vmem:[%s358 + $0x38] sm:$0xff]
        %v419 = vld [vmem:[#allocation5] sm:$0xff]
        %v420 = vld [vmem:[#allocation5 + $0x8] sm:$0xff]
        %v421 = vld [vmem:[#allocation5 + $0x10] sm:$0xff]
        %v422 = vld [vmem:[#allocation5 + $0x18] sm:$0xff]
        %v423 = vld [vmem:[#allocation5 + $0x20] sm:$0xff]
        %v424 = vld [vmem:[#allocation5 + $0x28] sm:$0xff]
        %v425 = vld [vmem:[#allocation5 + $0x30] sm:$0xff]
        %v426 = vld [vmem:[#allocation5 + $0x38] sm:$0xff]
        %v427 = vld [vmem:[#allocation5 + $0x40] sm:$0xff]
        %v428 = vld [vmem:[#allocation5 + $0x48] sm:$0xff]
        %v429 = vld [vmem:[#allocation5 + $0x50] sm:$0xff]
        %v430 = vld [vmem:[#allocation5 + $0x58] sm:$0xff]
        %v431 = vld [vmem:[#allocation5 + $0x60] sm:$0xff]
        %v432 = vld [vmem:[#allocation5 + $0x68] sm:$0xff]
        %v433 = vld [vmem:[#allocation5 + $0x70] sm:$0xff]
        %v434 = vld [vmem:[#allocation5 + $0x78] sm:$0xff]
        %v435 = vld [vmem:[%s2] sm:$0x1]
        %v437 = vlaneseq
        %v438 = vshrl.u32 %v437, 7
        %v439 = vsub.s32 0, %v438
        %v440 = vrot.slane %v435, %v439
        %442 = vmatprep.subr.mxu0 0.0
        %443 = vmatpush1.msra.mxu0 %v419
        %444 = vmatprep.subr.mxu0 0.0
        %445 = vmatpush1.msra.mxu0 %v420
        %446 = vmatprep.subr.mxu0 0.0
        %447 = vmatpush1.msra.mxu0 %v421
        %448 = vmatprep.subr.mxu0 0.0
        %449 = vmatpush1.msra.mxu0 %v422
        %450 = vmatprep.subr.mxu0 0.0
        %451 = vmatpush1.msra.mxu0 %v423
        %452 = vmatprep.subr.mxu0 0.0
        %453 = vmatpush1.msra.mxu0 %v424
        %454 = vmatprep.subr.mxu0 0.0
        %455 = vmatpush1.msra.mxu0 %v425
        %456 = vmatprep.subr.mxu0 0.0
        %457 = vmatpush1.msra.mxu0 %v426
        %458 = vmatprep.subr.mxu0 0.0
        %459 = vmatpush1.msra.mxu0 %v427
        %460 = vmatprep.subr.mxu0 0.0
        %461 = vmatpush1.msra.mxu0 %v428
        %462 = vmatprep.subr.mxu0 0.0
        %463 = vmatpush1.msra.mxu0 %v429
        %464 = vmatprep.subr.mxu0 0.0
        %465 = vmatpush1.msra.mxu0 %v430
        %466 = vmatprep.subr.mxu0 0.0
        %467 = vmatpush1.msra.mxu0 %v431
        %468 = vmatprep.subr.mxu0 0.0
        %469 = vmatpush1.msra.mxu0 %v432
        %470 = vmatprep.subr.mxu0 0.0
        %471 = vmatpush1.msra.mxu0 %v433
        %472 = vmatprep.subr.mxu0 0.0
        %473 = vmatpush1.msra.mxu0 %v434
        %474 = vmatprep.subr.mxu0 0.0
        %475 = vmatpush1.msra.mxu0 0.0
        %476 = vmatprep.subr.mxu0 0.0
        %477 = vmatpush1.msra.mxu0 0.0
        %478 = vmatprep.subr.mxu0 0.0
        %479 = vmatpush1.msra.mxu0 0.0
        %480 = vmatprep.subr.mxu0 0.0
        %481 = vmatpush1.msra.mxu0 0.0
        %482 = vmatprep.subr.mxu0 0.0
        %483 = vmatpush1.msra.mxu0 0.0
        %484 = vmatprep.subr.mxu0 0.0
        %485 = vmatpush1.msra.mxu0 0.0
        %486 = vmatprep.subr.mxu0 0.0
        %487 = vmatpush1.msra.mxu0 0.0
        %488 = vmatprep.subr.mxu0 0.0
        %489 = vmatpush1.msra.mxu0 0.0
        %490 = vmatprep.subr.mxu0 0.0
        %491 = vmatpush1.msra.mxu0 0.0
        %492 = vmatprep.subr.mxu0 0.0
        %493 = vmatpush1.msra.mxu0 0.0
        %494 = vmatprep.subr.mxu0 0.0
        %495 = vmatpush1.msra.mxu0 0.0
        %496 = vmatprep.subr.mxu0 0.0
        %497 = vmatpush1.msra.mxu0 0.0
        %498 = vmatprep.subr.mxu0 0.0
        %499 = vmatpush1.msra.mxu0 0.0
        %500 = vmatprep.subr.mxu0 0.0
        %501 = vmatpush1.msra.mxu0 0.0
        %502 = vmatprep.subr.mxu0 0.0
        %503 = vmatpush1.msra.mxu0 0.0
        %504 = vmatprep.subr.mxu0 0.0
        %505 = vmatpush1.msra.mxu0 0.0
        %506 = vmatprep.mubr.f32.mxu0 0.0
        %507 = vmatmul.mubr.f32.gmra.mrb[0].mxu0 %v411
        %v508 = vpop.f32.mrb[0].mxu0
        %v509 = vadd.f32 %v440, %v508
        %v510 = vpop.f32.mrb[0].mxu0
        %511 = vmatprep.mubr.f32.mxu0 0.0
        %512 = vmatmul.mubr.f32.gmra.mrb[0].mxu0 %v412
        %v513 = vpop.f32.mrb[0].mxu0
        %v514 = vadd.f32 %v440, %v513
        %v515 = vpop.f32.mrb[0].mxu0
        %516 = vmatprep.mubr.f32.mxu0 0.0
        %517 = vmatmul.mubr.f32.gmra.mrb[0].mxu0 %v413
        %v518 = vpop.f32.mrb[0].mxu0
        %v519 = vadd.f32 %v440, %v518
        %v520 = vpop.f32.mrb[0].mxu0
        %521 = vmatprep.mubr.f32.mxu0 0.0
        %522 = vmatmul.mubr.f32.gmra.mrb[0].mxu0 %v414
        %v523 = vpop.f32.mrb[0].mxu0
        %v524 = vadd.f32 %v440, %v523
        %v525 = vpop.f32.mrb[0].mxu0
        %526 = vmatprep.mubr.f32.mxu0 0.0
        %527 = vmatmul.mubr.f32.gmra.mrb[0].mxu0 %v415
        %v528 = vpop.f32.mrb[0].mxu0
        %v529 = vadd.f32 %v440, %v528
        %v530 = vpop.f32.mrb[0].mxu0
        %531 = vmatprep.mubr.f32.mxu0 0.0
        %532 = vmatmul.mubr.f32.gmra.mrb[0].mxu0 %v416
        %v533 = vpop.f32.mrb[0].mxu0
        %v534 = vadd.f32 %v440, %v533
        %v535 = vpop.f32.mrb[0].mxu0
        %536 = vmatprep.mubr.f32.mxu0 0.0
        %537 = vmatmul.mubr.f32.gmra.mrb[0].mxu0 %v417
        %v538 = vpop.f32.mrb[0].mxu0
        %v539 = vadd.f32 %v440, %v538
        %v540 = vpop.f32.mrb[0].mxu0
        %541 = vmatprep.mubr.f32.mxu0 0.0
        %542 = vmatmul.mubr.f32.gmra.mrb[0].mxu0 %v418
        %v543 = vpop.f32.mrb[0].mxu0
        %v544 = vadd.f32 %v440, %v543
        %v545 = vpop.f32.mrb[0].mxu0
        %546 = vdwg.mxu0
        %v547 = vmax.f32 %v509, 0.0
        %v548 = vmax.f32 %v514, 0.0
        %v549 = vmax.f32 %v519, 0.0
        %v550 = vmax.f32 %v524, 0.0
        %v551 = vmax.f32 %v529, 0.0
        %v552 = vmax.f32 %v534, 0.0
        %v553 = vmax.f32 %v539, 0.0
        %v554 = vmax.f32 %v544, 0.0
        %v555 = vld [vmem:[#allocation7] sm:$0xff]
        %v556 = vld [vmem:[#allocation7 + $0x8] sm:$0xff]
        %v557 = vld [vmem:[#allocation7 + $0x10] sm:$0xff]
        %v558 = vld [vmem:[#allocation7 + $0x18] sm:$0xff]
        %v559 = vld [vmem:[#allocation7 + $0x20] sm:$0xff]
        %v560 = vld [vmem:[#allocation7 + $0x28] sm:$0xff]
        %v561 = vld [vmem:[#allocation7 + $0x30] sm:$0xff]
        %v562 = vld [vmem:[#allocation7 + $0x38] sm:$0xff]
        %v563 = vld [vmem:[#allocation7 + $0x40] sm:$0xff]
        %v564 = vld [vmem:[#allocation7 + $0x48] sm:$0xff]
        %v565 = vld [vmem:[#allocation7 + $0x50] sm:$0xff]
        %v566 = vld [vmem:[#allocation7 + $0x58] sm:$0xff]
        %v567 = vld [vmem:[#allocation7 + $0x60] sm:$0xff]
        %v568 = vld [vmem:[#allocation7 + $0x68] sm:$0xff]
        %v569 = vld [vmem:[#allocation7 + $0x70] sm:$0xff]
        %v570 = vld [vmem:[#allocation7 + $0x78] sm:$0xff]
        %v571 = vld [vmem:[%s4] sm:$0x1]
        %v573 = vlaneseq
        %v574 = vshrl.u32 %v573, 7
        %v575 = vsub.s32 0, %v574
        %v576 = vrot.slane %v571, %v575
        %578 = vmatprep.subr.mxu0 0.0
        %579 = vmatpush1.msra.mxu0 %v555
        %580 = vmatprep.subr.mxu0 0.0
        %581 = vmatpush1.msra.mxu0 %v556
        %582 = vmatprep.subr.mxu0 0.0
        %583 = vmatpush1.msra.mxu0 %v557
        %584 = vmatprep.subr.mxu0 0.0
        %585 = vmatpush1.msra.mxu0 %v558
        %586 = vmatprep.subr.mxu0 0.0
        %587 = vmatpush1.msra.mxu0 %v559
        %588 = vmatprep.subr.mxu0 0.0
        %589 = vmatpush1.msra.mxu0 %v560
        %590 = vmatprep.subr.mxu0 0.0
        %591 = vmatpush1.msra.mxu0 %v561
        %592 = vmatprep.subr.mxu0 0.0
        %593 = vmatpush1.msra.mxu0 %v562
        %594 = vmatprep.subr.mxu0 0.0
        %595 = vmatpush1.msra.mxu0 %v563
        %596 = vmatprep.subr.mxu0 0.0
        %597 = vmatpush1.msra.mxu0 %v564
        %598 = vmatprep.subr.mxu0 0.0
        %599 = vmatpush1.msra.mxu0 %v565
        %600 = vmatprep.subr.mxu0 0.0
        %601 = vmatpush1.msra.mxu0 %v566
        %602 = vmatprep.subr.mxu0 0.0
        %603 = vmatpush1.msra.mxu0 %v567
        %604 = vmatprep.subr.mxu0 0.0
        %605 = vmatpush1.msra.mxu0 %v568
        %606 = vmatprep.subr.mxu0 0.0
        %607 = vmatpush1.msra.mxu0 %v569
        %608 = vmatprep.subr.mxu0 0.0
        %609 = vmatpush1.msra.mxu0 %v570
        %610 = vmatprep.subr.mxu0 0.0
        %611 = vmatpush1.msra.mxu0 0.0
        %612 = vmatprep.subr.mxu0 0.0
        %613 = vmatpush1.msra.mxu0 0.0
        %614 = vmatprep.subr.mxu0 0.0
        %615 = vmatpush1.msra.mxu0 0.0
        %616 = vmatprep.subr.mxu0 0.0
        %617 = vmatpush1.msra.mxu0 0.0
        %618 = vmatprep.subr.mxu0 0.0
        %619 = vmatpush1.msra.mxu0 0.0
        %620 = vmatprep.subr.mxu0 0.0
        %621 = vmatpush1.msra.mxu0 0.0
        %622 = vmatprep.subr.mxu0 0.0
        %623 = vmatpush1.msra.mxu0 0.0
        %624 = vmatprep.subr.mxu0 0.0
        %625 = vmatpush1.msra.mxu0 0.0
        %626 = vmatprep.subr.mxu0 0.0
        %627 = vmatpush1.msra.mxu0 0.0
        %628 = vmatprep.subr.mxu0 0.0
        %629 = vmatpush1.msra.mxu0 0.0
        %630 = vmatprep.subr.mxu0 0.0
        %631 = vmatpush1.msra.mxu0 0.0
        %632 = vmatprep.subr.mxu0 0.0
        %633 = vmatpush1.msra.mxu0 0.0
        %634 = vmatprep.subr.mxu0 0.0
        %635 = vmatpush1.msra.mxu0 0.0
        %636 = vmatprep.subr.mxu0 0.0
        %637 = vmatpush1.msra.mxu0 0.0
        %638 = vmatprep.subr.mxu0 0.0
        %639 = vmatpush1.msra.mxu0 0.0
        %640 = vmatprep.subr.mxu0 0.0
        %641 = vmatpush1.msra.mxu0 0.0
        %642 = vmatprep.mubr.f32.mxu0 0.0
        %643 = vmatmul.mubr.f32.gmra.mrb[0].mxu0 %v547
        %v644 = vpop.f32.mrb[0].mxu0
        %v645 = vadd.f32 %v576, %v644
        %v646 = vpop.f32.mrb[0].mxu0
        %647 = vmatprep.mubr.f32.mxu0 0.0
        %648 = vmatmul.mubr.f32.gmra.mrb[0].mxu0 %v548
        %v649 = vpop.f32.mrb[0].mxu0
        %v650 = vadd.f32 %v576, %v649
        %v651 = vpop.f32.mrb[0].mxu0
        %652 = vmatprep.mubr.f32.mxu0 0.0
        %653 = vmatmul.mubr.f32.gmra.mrb[0].mxu0 %v549
        %v654 = vpop.f32.mrb[0].mxu0
        %v655 = vadd.f32 %v576, %v654
        %v656 = vpop.f32.mrb[0].mxu0
        %657 = vmatprep.mubr.f32.mxu0 0.0
        %658 = vmatmul.mubr.f32.gmra.mrb[0].mxu0 %v550
        %v659 = vpop.f32.mrb[0].mxu0
        %v660 = vadd.f32 %v576, %v659
        %v661 = vpop.f32.mrb[0].mxu0
        %662 = vmatprep.mubr.f32.mxu0 0.0
        %663 = vmatmul.mubr.f32.gmra.mrb[0].mxu0 %v551
        %v664 = vpop.f32.mrb[0].mxu0
        %v665 = vadd.f32 %v576, %v664
        %v666 = vpop.f32.mrb[0].mxu0
        %667 = vmatprep.mubr.f32.mxu0 0.0
        %668 = vmatmul.mubr.f32.gmra.mrb[0].mxu0 %v552
        %v669 = vpop.f32.mrb[0].mxu0
        %v670 = vadd.f32 %v576, %v669
        %v671 = vpop.f32.mrb[0].mxu0
        %672 = vmatprep.mubr.f32.mxu0 0.0
        %673 = vmatmul.mubr.f32.gmra.mrb[0].mxu0 %v553
        %v674 = vpop.f32.mrb[0].mxu0
        %v675 = vadd.f32 %v576, %v674
        %v676 = vpop.f32.mrb[0].mxu0
        %677 = vmatprep.mubr.f32.mxu0 0.0
        %678 = vmatmul.mubr.f32.gmra.mrb[0].mxu0 %v554
        %v679 = vpop.f32.mrb[0].mxu0
        %v680 = vadd.f32 %v576, %v679
        %v681 = vpop.f32.mrb[0].mxu0
        %682 = vdwg.mxu0
        %v683 = vmax.f32 %v645, 0.0
        %v684 = vmax.f32 %v650, 0.0
        %v685 = vmax.f32 %v655, 0.0
        %v686 = vmax.f32 %v660, 0.0
        %v687 = vmax.f32 %v665, 0.0
        %v688 = vmax.f32 %v670, 0.0
        %v689 = vmax.f32 %v675, 0.0
        %v690 = vmax.f32 %v680, 0.0
        %v691 = vld [vmem:[#allocation8] sm:$0xff]
        %v692 = vld [vmem:[#allocation8 + $0x8] sm:$0xff]
        %v693 = vld [vmem:[#allocation8 + $0x10] sm:$0xff]
        %v694 = vld [vmem:[#allocation8 + $0x18] sm:$0xff]
        %v695 = vld [vmem:[#allocation8 + $0x20] sm:$0xff]
        %v696 = vld [vmem:[#allocation8 + $0x28] sm:$0xff]
        %v697 = vld [vmem:[#allocation8 + $0x30] sm:$0xff]
        %v698 = vld [vmem:[#allocation8 + $0x38] sm:$0xff]
        %v699 = vld [vmem:[#allocation8 + $0x40] sm:$0xff]
        %v700 = vld [vmem:[#allocation8 + $0x48] sm:$0xff]
        %v701 = vld [vmem:[#allocation8 + $0x50] sm:$0xff]
        %v702 = vld [vmem:[#allocation8 + $0x58] sm:$0xff]
        %v703 = vld [vmem:[#allocation8 + $0x60] sm:$0xff]
        %v704 = vld [vmem:[#allocation8 + $0x68] sm:$0xff]
        %v705 = vld [vmem:[#allocation8 + $0x70] sm:$0xff]
        %v706 = vld [vmem:[#allocation8 + $0x78] sm:$0xff]
        %v707 = vld [vmem:[%s6] sm:$0x1]
        %v709 = vlaneseq
        %v710 = vshrl.u32 %v709, 7
        %v711 = vsub.s32 0, %v710
        %v712 = vrot.slane %v707, %v711
        %714 = vmatprep.subr.mxu0 0.0
        %715 = vmatpush1.msra.mxu0 %v691
        %716 = vmatprep.subr.mxu0 0.0
        %717 = vmatpush1.msra.mxu0 %v692
        %718 = vmatprep.subr.mxu0 0.0
        %719 = vmatpush1.msra.mxu0 %v693
        %720 = vmatprep.subr.mxu0 0.0
        %721 = vmatpush1.msra.mxu0 %v694
        %722 = vmatprep.subr.mxu0 0.0
        %723 = vmatpush1.msra.mxu0 %v695
        %724 = vmatprep.subr.mxu0 0.0
        %725 = vmatpush1.msra.mxu0 %v696
        %726 = vmatprep.subr.mxu0 0.0
        %727 = vmatpush1.msra.mxu0 %v697
        %728 = vmatprep.subr.mxu0 0.0
        %729 = vmatpush1.msra.mxu0 %v698
        %730 = vmatprep.subr.mxu0 0.0
        %731 = vmatpush1.msra.mxu0 %v699
        %732 = vmatprep.subr.mxu0 0.0
        %733 = vmatpush1.msra.mxu0 %v700
        %734 = vmatprep.subr.mxu0 0.0
        %735 = vmatpush1.msra.mxu0 %v701
        %736 = vmatprep.subr.mxu0 0.0
        %737 = vmatpush1.msra.mxu0 %v702
        %738 = vmatprep.subr.mxu0 0.0
        %739 = vmatpush1.msra.mxu0 %v703
        %740 = vmatprep.subr.mxu0 0.0
        %741 = vmatpush1.msra.mxu0 %v704
        %742 = vmatprep.subr.mxu0 0.0
        %743 = vmatpush1.msra.mxu0 %v705
        %744 = vmatprep.subr.mxu0 0.0
        %745 = vmatpush1.msra.mxu0 %v706
        %746 = vmatprep.subr.mxu0 0.0
        %747 = vmatpush1.msra.mxu0 0.0
        %748 = vmatprep.subr.mxu0 0.0
        %749 = vmatpush1.msra.mxu0 0.0
        %750 = vmatprep.subr.mxu0 0.0
        %751 = vmatpush1.msra.mxu0 0.0
        %752 = vmatprep.subr.mxu0 0.0
        %753 = vmatpush1.msra.mxu0 0.0
        %754 = vmatprep.subr.mxu0 0.0
        %755 = vmatpush1.msra.mxu0 0.0
        %756 = vmatprep.subr.mxu0 0.0
        %757 = vmatpush1.msra.mxu0 0.0
        %758 = vmatprep.subr.mxu0 0.0
        %759 = vmatpush1.msra.mxu0 0.0
        %760 = vmatprep.subr.mxu0 0.0
        %761 = vmatpush1.msra.mxu0 0.0
        %762 = vmatprep.subr.mxu0 0.0
        %763 = vmatpush1.msra.mxu0 0.0
        %764 = vmatprep.subr.mxu0 0.0
        %765 = vmatpush1.msra.mxu0 0.0
        %766 = vmatprep.subr.mxu0 0.0
        %767 = vmatpush1.msra.mxu0 0.0
        %768 = vmatprep.subr.mxu0 0.0
        %769 = vmatpush1.msra.mxu0 0.0
        %770 = vmatprep.subr.mxu0 0.0
        %771 = vmatpush1.msra.mxu0 0.0
        %772 = vmatprep.subr.mxu0 0.0
        %773 = vmatpush1.msra.mxu0 0.0
        %774 = vmatprep.subr.mxu0 0.0
        %775 = vmatpush1.msra.mxu0 0.0
        %776 = vmatprep.subr.mxu0 0.0
        %777 = vmatpush1.msra.mxu0 0.0
        %778 = vmatprep.mubr.f32.mxu0 0.0
        %779 = vmatmul.mubr.f32.gmra.mrb[0].mxu0 %v683
        %v780 = vpop.f32.mrb[0].mxu0
        %v781 = vadd.f32 %v712, %v780
        %v782 = vpop.f32.mrb[0].mxu0
        %783 = vmatprep.mubr.f32.mxu0 0.0
        %784 = vmatmul.mubr.f32.gmra.mrb[0].mxu0 %v684
        %v785 = vpop.f32.mrb[0].mxu0
        %v786 = vadd.f32 %v712, %v785
        %v787 = vpop.f32.mrb[0].mxu0
        %788 = vmatprep.mubr.f32.mxu0 0.0
        %789 = vmatmul.mubr.f32.gmra.mrb[0].mxu0 %v685
        %v790 = vpop.f32.mrb[0].mxu0
        %v791 = vadd.f32 %v712, %v790
        %v792 = vpop.f32.mrb[0].mxu0
        %793 = vmatprep.mubr.f32.mxu0 0.0
        %794 = vmatmul.mubr.f32.gmra.mrb[0].mxu0 %v686
        %v795 = vpop.f32.mrb[0].mxu0
        %v796 = vadd.f32 %v712, %v795
        %v797 = vpop.f32.mrb[0].mxu0
        %798 = vmatprep.mubr.f32.mxu0 0.0
        %799 = vmatmul.mubr.f32.gmra.mrb[0].mxu0 %v687
        %v800 = vpop.f32.mrb[0].mxu0
        %v801 = vadd.f32 %v712, %v800
        %v802 = vpop.f32.mrb[0].mxu0
        %803 = vmatprep.mubr.f32.mxu0 0.0
        %804 = vmatmul.mubr.f32.gmra.mrb[0].mxu0 %v688
        %v805 = vpop.f32.mrb[0].mxu0
        %v806 = vadd.f32 %v712, %v805
        %v807 = vpop.f32.mrb[0].mxu0
        %808 = vmatprep.mubr.f32.mxu0 0.0
        %809 = vmatmul.mubr.f32.gmra.mrb[0].mxu0 %v689
        %v810 = vpop.f32.mrb[0].mxu0
        %v811 = vadd.f32 %v712, %v810
        %v812 = vpop.f32.mrb[0].mxu0
        %813 = vmatprep.mubr.f32.mxu0 0.0
        %814 = vmatmul.mubr.f32.gmra.mrb[0].mxu0 %v690
        %v815 = vpop.f32.mrb[0].mxu0
        %v816 = vadd.f32 %v712, %v815
        %v817 = vpop.f32.mrb[0].mxu0
        %818 = vdwg.mxu0
        %v819 = vmax.f32 %v781, 0.0
        %v820 = vmax.f32 %v786, 0.0
        %v821 = vmax.f32 %v791, 0.0
        %v822 = vmax.f32 %v796, 0.0
        %v823 = vmax.f32 %v801, 0.0
        %v824 = vmax.f32 %v806, 0.0
        %v825 = vmax.f32 %v811, 0.0
        %v826 = vmax.f32 %v816, 0.0
        %v827 = vld [vmem:[#allocation10] sm:$0xff]
        %v828 = vld [vmem:[#allocation10 + $0x8] sm:$0xff]
        %v829 = vld [vmem:[#allocation10 + $0x10] sm:$0xff]
        %v830 = vld [vmem:[#allocation10 + $0x18] sm:$0xff]
        %v831 = vld [vmem:[#allocation10 + $0x20] sm:$0xff]
        %v832 = vld [vmem:[#allocation10 + $0x28] sm:$0xff]
        %v833 = vld [vmem:[#allocation10 + $0x30] sm:$0xff]
        %v834 = vld [vmem:[#allocation10 + $0x38] sm:$0xff]
        %v835 = vld [vmem:[#allocation10 + $0x40] sm:$0xff]
        %v836 = vld [vmem:[#allocation10 + $0x48] sm:$0xff]
        %v837 = vld [vmem:[#allocation10 + $0x50] sm:$0xff]
        %v838 = vld [vmem:[#allocation10 + $0x58] sm:$0xff]
        %v839 = vld [vmem:[#allocation10 + $0x60] sm:$0xff]
        %v840 = vld [vmem:[#allocation10 + $0x68] sm:$0xff]
        %v841 = vld [vmem:[#allocation10 + $0x70] sm:$0xff]
        %v842 = vld [vmem:[#allocation10 + $0x78] sm:$0xff]
        %v843 = vld [vmem:[%s8] sm:$0x1]
        %v845 = vlaneseq
        %v846 = vshrl.u32 %v845, 7
        %v847 = vsub.s32 0, %v846
        %v848 = vrot.slane %v843, %v847
        %850 = vmatprep.subr.mxu0 0.0
        %851 = vmatpush1.msra.mxu0 %v827
        %852 = vmatprep.subr.mxu0 0.0
        %853 = vmatpush1.msra.mxu0 %v828
        %854 = vmatprep.subr.mxu0 0.0
        %855 = vmatpush1.msra.mxu0 %v829
        %856 = vmatprep.subr.mxu0 0.0
        %857 = vmatpush1.msra.mxu0 %v830
        %858 = vmatprep.subr.mxu0 0.0
        %859 = vmatpush1.msra.mxu0 %v831
        %860 = vmatprep.subr.mxu0 0.0
        %861 = vmatpush1.msra.mxu0 %v832
        %862 = vmatprep.subr.mxu0 0.0
        %863 = vmatpush1.msra.mxu0 %v833
        %864 = vmatprep.subr.mxu0 0.0
        %865 = vmatpush1.msra.mxu0 %v834
        %866 = vmatprep.subr.mxu0 0.0
        %867 = vmatpush1.msra.mxu0 %v835
        %868 = vmatprep.subr.mxu0 0.0
        %869 = vmatpush1.msra.mxu0 %v836
        %870 = vmatprep.subr.mxu0 0.0
        %871 = vmatpush1.msra.mxu0 %v837
        %872 = vmatprep.subr.mxu0 0.0
        %873 = vmatpush1.msra.mxu0 %v838
        %874 = vmatprep.subr.mxu0 0.0
        %875 = vmatpush1.msra.mxu0 %v839
        %876 = vmatprep.subr.mxu0 0.0
        %877 = vmatpush1.msra.mxu0 %v840
        %878 = vmatprep.subr.mxu0 0.0
        %879 = vmatpush1.msra.mxu0 %v841
        %880 = vmatprep.subr.mxu0 0.0
        %881 = vmatpush1.msra.mxu0 %v842
        %882 = vmatprep.subr.mxu0 0.0
        %883 = vmatpush1.msra.mxu0 0.0
        %884 = vmatprep.subr.mxu0 0.0
        %885 = vmatpush1.msra.mxu0 0.0
        %886 = vmatprep.subr.mxu0 0.0
        %887 = vmatpush1.msra.mxu0 0.0
        %888 = vmatprep.subr.mxu0 0.0
        %889 = vmatpush1.msra.mxu0 0.0
        %890 = vmatprep.subr.mxu0 0.0
        %891 = vmatpush1.msra.mxu0 0.0
        %892 = vmatprep.subr.mxu0 0.0
        %893 = vmatpush1.msra.mxu0 0.0
        %894 = vmatprep.subr.mxu0 0.0
        %895 = vmatpush1.msra.mxu0 0.0
        %896 = vmatprep.subr.mxu0 0.0
        %897 = vmatpush1.msra.mxu0 0.0
        %898 = vmatprep.subr.mxu0 0.0
        %899 = vmatpush1.msra.mxu0 0.0
        %900 = vmatprep.subr.mxu0 0.0
        %901 = vmatpush1.msra.mxu0 0.0
        %902 = vmatprep.subr.mxu0 0.0
        %903 = vmatpush1.msra.mxu0 0.0
        %904 = vmatprep.subr.mxu0 0.0
        %905 = vmatpush1.msra.mxu0 0.0
        %906 = vmatprep.subr.mxu0 0.0
        %907 = vmatpush1.msra.mxu0 0.0
        %908 = vmatprep.subr.mxu0 0.0
        %909 = vmatpush1.msra.mxu0 0.0
        %910 = vmatprep.subr.mxu0 0.0
        %911 = vmatpush1.msra.mxu0 0.0
        %912 = vmatprep.subr.mxu0 0.0
        %913 = vmatpush1.msra.mxu0 0.0
        %914 = vmatprep.mubr.f32.mxu0 0.0
        %915 = vmatmul.mubr.f32.gmra.mrb[0].mxu0 %v819
        %v916 = vpop.f32.mrb[0].mxu0
        %v917 = vadd.f32 %v848, %v916
        %v918 = vpop.f32.mrb[0].mxu0
        %919 = vmatprep.mubr.f32.mxu0 0.0
        %920 = vmatmul.mubr.f32.gmra.mrb[0].mxu0 %v820
        %v921 = vpop.f32.mrb[0].mxu0
        %v922 = vadd.f32 %v848, %v921
        %v923 = vpop.f32.mrb[0].mxu0
        %924 = vmatprep.mubr.f32.mxu0 0.0
        %925 = vmatmul.mubr.f32.gmra.mrb[0].mxu0 %v821
        %v926 = vpop.f32.mrb[0].mxu0
        %v927 = vadd.f32 %v848, %v926
        %v928 = vpop.f32.mrb[0].mxu0
        %929 = vmatprep.mubr.f32.mxu0 0.0
        %930 = vmatmul.mubr.f32.gmra.mrb[0].mxu0 %v822
        %v931 = vpop.f32.mrb[0].mxu0
        %v932 = vadd.f32 %v848, %v931
        %v933 = vpop.f32.mrb[0].mxu0
        %934 = vmatprep.mubr.f32.mxu0 0.0
        %935 = vmatmul.mubr.f32.gmra.mrb[0].mxu0 %v823
        %v936 = vpop.f32.mrb[0].mxu0
        %v937 = vadd.f32 %v848, %v936
        %v938 = vpop.f32.mrb[0].mxu0
        %939 = vmatprep.mubr.f32.mxu0 0.0
        %940 = vmatmul.mubr.f32.gmra.mrb[0].mxu0 %v824
        %v941 = vpop.f32.mrb[0].mxu0
        %v942 = vadd.f32 %v848, %v941
        %v943 = vpop.f32.mrb[0].mxu0
        %944 = vmatprep.mubr.f32.mxu0 0.0
        %945 = vmatmul.mubr.f32.gmra.mrb[0].mxu0 %v825
        %v946 = vpop.f32.mrb[0].mxu0
        %v947 = vadd.f32 %v848, %v946
        %v948 = vpop.f32.mrb[0].mxu0
        %949 = vmatprep.mubr.f32.mxu0 0.0
        %950 = vmatmul.mubr.f32.gmra.mrb[0].mxu0 %v826
        %v951 = vpop.f32.mrb[0].mxu0
        %v952 = vadd.f32 %v848, %v951
        %v953 = vpop.f32.mrb[0].mxu0
        %954 = vdwg.mxu0
        %955 = vst [vmem:[%s408] sm:$0xff] %v917
        %956 = vst [vmem:[%s408 + $0x8] sm:$0xff] %v922
        %957 = vst [vmem:[%s408 + $0x10] sm:$0xff] %v927
        %958 = vst [vmem:[%s408 + $0x18] sm:$0xff] %v932
        %959 = vst [vmem:[%s408 + $0x20] sm:$0xff] %v937
        %960 = vst [vmem:[%s408 + $0x28] sm:$0xff] %v942
        %961 = vst [vmem:[%s408 + $0x30] sm:$0xff] %v947
        %962 = vst [vmem:[%s408 + $0x38] sm:$0xff] %v952
        %s963 = sand.u32 %s230, 1
        %s964 = scalar_lea.sflag [#allocation4], %s963
        %s965 = sand.u32 %s230, 1
        %s966 = smul.addr %s965, 64
        %s967 = scalar_lea.vmem [#allocation11], %s966
        // Predicated region
        $region77: #{tpu_custom_call.1} parent=55 // pred_check
          %p968 = pneg %p240
        $region78: #{tpu_custom_call.1} parent=55 // pred_check_branch
          %970 = sbr.rel (%p968) target = $region80
        $region79: #{tpu_custom_call.1} parent=55 // pred_region
          %s971 = smul.u32 8, %s28
          %s973 = ssub.s32 1024, 1024
          %974 = vsyncadd %s964, %s973
          %s975 = smul.addr %s971, 128
          %s976 = scalar_lea.hbm %s9, %s975
          %s977 = sshll.u32 %s967, 4
          %s978 = int_to_ptr.vmem [resolvable:$true] %s977
          %983 = dma.vmem_to_hbm [thread:$0]  %s978, 1024, %s976, %s964, 128, 128, 8
        $region80: #{tpu_custom_call.1} parent=55 // pred_fallthru
          _
      $region56: #{tpu_custom_call.1} parent=5 // pred_fallthru
        _
      %p984 = scmp.le.s32.totalorder 2, %s23
      // Predicated region
      $region81: #{tpu_custom_call.1} parent=5 // pred_check
        %p985 = pneg %p984
      $region82: #{tpu_custom_call.1} parent=5 // pred_check_branch
        %987 = sbr.rel (%p985) target = $region84
      $region83: #{tpu_custom_call.1} parent=5 // pred_region
        %s988 = ssub.s32 %s23, 2
        // Predicated region
        $region85: #{tpu_custom_call.1} parent=83 // pred_check
          %p989 = pneg %p246
        $region86: #{tpu_custom_call.1} parent=83 // pred_check_branch
          %991 = sbr.rel (%p989) target = $region88
        $region87: #{tpu_custom_call.1} parent=83 // pred_region
          %s992 = sand.u32 %s231, 1
          %s993 = scalar_lea.sflag [#allocation4], %s992
          %s994 = sand.u32 %s231, 1
          %s995 = smul.addr %s994, 64
          %s996 = scalar_lea.vmem [#allocation11], %s995
          %997 = dma.done %s993, 1024
        $region88: #{tpu_custom_call.1} parent=83 // pred_fallthru
          _
      $region84: #{tpu_custom_call.1} parent=5 // pred_fallthru
        _
    $region6: #{tpu_custom_call.1} parent=1 // loop_footer
      %s27 = sadd.s32 1, %s23
    $region7: #{tpu_custom_call.1} parent=1 // loop_footer_branch
      %22 = sbr.rel target = $region3
    $region8: #{tpu_custom_call.1} parent=1 // loop_exit
      _
    %998 = vsyncpa [#allocation3], 1
    %s999 = scalar_lea.sflag [#allocation3], 1
    %1000 = vsyncpa %s999, 1
    %1001 = vsyncpa [#allocation6], 1
    %1002 = vsyncpa [#allocation9], 1
    %1003 = vsyncpa [#allocation4], 1
    %s1004 = scalar_lea.sflag [#allocation4], 1
    %1005 = vsyncpa %s1004, 1

// kernel: tpu_custom_call.1
$region0: #{tpu_custom_call.1}
  #allocation0 [shape = 'u32[]', space=smem, size = 0x4, offset = 0x4, fixed_abs, tag = 'smem constant byte address 0x4 - core index']
  #allocation1 [shape = 'u32[144,128]{1,0:T(1,128)}', space=vmem, size = 0x12000, scoped, tag = 'internal scratch']
  %s0 = inlined_call_operand.hbm [shape: f32[128,128], index: 0, kind: input, shape index: {}]
  %s1 = inlined_call_operand.hbm [shape: f32[128,128], index: 1, kind: input, shape index: {}]
  %s2 = inlined_call_operand.vmem [shape: f32[1,128], index: 2, kind: input, shape index: {}]
  %s3 = inlined_call_operand.hbm [shape: f32[128,128], index: 3, kind: input, shape index: {}]
  %s4 = inlined_call_operand.vmem [shape: f32[1,128], index: 4, kind: input, shape index: {}]
  %s5 = inlined_call_operand.hbm [shape: f32[128,128], index: 5, kind: input, shape index: {}]
  %s6 = inlined_call_operand.vmem [shape: f32[1,128], index: 6, kind: input, shape index: {}]
  %s7 = inlined_call_operand.hbm [shape: f32[128,128], index: 7, kind: input, shape index: {}]
  %s8 = inlined_call_operand.vmem [shape: f32[1,128], index: 8, kind: input, shape index: {}]
  %s9 = inlined_call_operand.hbm [shape: f32[128,128], index: 9, kind: output, shape index: {}]
  %s10 = sld [smem:[#allocation0]]
  $region89: #{tpu_custom_call.1} parent=0
    _
  %s12 = ssub.s32 1, %s10
  %s13 = scalar_select 0, %s12, %s10
  $region1: #{tpu_custom_call.1} parent=0
    #allocation2 [shape = 'u8[65536]{0}', space=vmem, size = 0x10000, scoped, tag = 'input window, operand 0']
    #allocation3 [shape = 's32[2]{0}', space=sflag, size = 0x8, scoped, tag = 'scoped memory for tpu_custom_call.1']
    #allocation4 [shape = 's32[2]{0}', space=sflag, size = 0x8, scoped, tag = 'scoped memory for tpu_custom_call.1']
    #allocation5 [shape = 'u8[65536]{0}', space=vmem, size = 0x10000, scoped, tag = 'input window, operand 1, single buffered']
    #allocation6 [shape = 's32[1]{0}', space=sflag, size = 0x4, scoped, tag = 'scoped memory for tpu_custom_call.1']
    #allocation7 [shape = 'u8[65536]{0}', space=vmem, size = 0x10000, scoped, tag = 'input window, operand 3, single buffered']
    #allocation8 [shape = 'u8[65536]{0}', space=vmem, size = 0x10000, scoped, tag = 'input window, operand 5, single buffered']
    #allocation9 [shape = 's32[1]{0}', space=sflag, size = 0x4, scoped, tag = 'scoped memory for tpu_custom_call.1']
    #allocation10 [shape = 'u8[65536]{0}', space=vmem, size = 0x10000, scoped, tag = 'input window, operand 7, single buffered']
    #allocation11 [shape = 'u8[65536]{0}', space=vmem, size = 0x10000, scoped, tag = 'output window, operand 0']
    %14 = vsyncpa [#allocation3], 0
    %s15 = scalar_lea.sflag [#allocation3], 1
    %16 = vsyncpa %s15, 0
    %17 = vsyncpa [#allocation6], 0
    %18 = vsyncpa [#allocation9], 0
    %19 = vsyncpa [#allocation4], 0
    %s20 = scalar_lea.sflag [#allocation4], 1
    %21 = vsyncpa %s20, 0
    loop: start=0, step=1, limit=4
    $region2: #{tpu_custom_call.1} parent=1 // loop_pre_header
      _
    $region3: #{tpu_custom_call.1} parent=1 // loop_header
      %s23 = sphi 0, %s27
      %p24 = scmp.ge.s32.totalorder %s23, 4
      %s33 = sphi 0, %s35
      %s36 = sphi 0, %s33
      %s37 = sphi 0, %s36
      %s53 = sphi 0, %s37
      %s57 = sphi 0, %s57
      %s59 = sphi 0, %s57
      %s60 = sphi 0, %s59
      %s74 = sphi 0, %s60
      %s78 = sphi 0, %s78
      %s80 = sphi 0, %s78
      %s81 = sphi 0, %s80
      %s95 = sphi 0, %s81
      %s99 = sphi 0, %s99
      %s101 = sphi 0, %s99
      %s102 = sphi 0, %s101
      %s116 = sphi 0, %s102
      %s120 = sphi 0, %s120
      %s122 = sphi 0, %s120
      %s123 = sphi 0, %s122
      %s137 = sphi 0, %s123
      %s141 = sphi 0, %s141
      %s143 = sphi 0, %s141
      %s144 = sphi 0, %s143
      %s158 = sphi 0, %s144
      %s162 = sphi 0, %s162
      %s164 = sphi 0, %s162
      %s165 = sphi 0, %s164
      %s179 = sphi 0, %s165
      %s183 = sphi 0, %s183
      %s185 = sphi 0, %s183
      %s186 = sphi 0, %s185
      %s200 = sphi 0, %s186
      %s204 = sphi 0, %s204
      %s206 = sphi 0, %s204
      %s207 = sphi 0, %s206
      %s221 = sphi 0, %s207
      %s227 = sphi 0, %s229
      %s230 = sphi 0, %s227
      %s231 = sphi 0, %s230
      %s247 = sphi 0, %s231
    $region4: #{tpu_custom_call.1} parent=1 // loop_header_branch
      %26 = sbr.rel (%p24) target = $region8
    $region5: #{tpu_custom_call.1} parent=1 // loop_body
      %s28 = ssub.s32 %s23, 1
      %s29 = ssub.s32 %s23, 2
      %s30 = sadd.s32 %s23, 1
      %s31 = ssub.s32 %s23, %s30
      %p32 = scmp.eq.s32.totalorder %s31, 0
      %s34 = sadd.s32 %s33, 1
      %s35 = scalar_select %p32, %s33, %s34
      %p38 = pneg %p32
      %p39 = scmp.eq.s32.totalorder %s23, 1
      %p40 = por %p38, %p39
      %p41 = scmp.ne.s32.totalorder %s33, %s36
      %p42 = scmp.eq.s32.totalorder %s23, 0
      %p43 = por %p41, %p42
      %p44 = scmp.ne.s32.totalorder %s33, %s36
      %p45 = scmp.eq.s32.totalorder %s28, 1
      %p46 = por %p44, %p45
      %p47 = scmp.ne.s32.totalorder %s36, %s37
      %p48 = scmp.eq.s32.totalorder %s28, 0
      %p49 = por %p47, %p48
      %p50 = scmp.ne.s32.totalorder %s36, %s37
      %p51 = scmp.eq.s32.totalorder %s29, 1
      %p52 = por %p50, %p51
      %p54 = scmp.ne.s32.totalorder %s37, %s53
      %p55 = scmp.eq.s32.totalorder %s29, 0
      %p56 = por %p54, %p55
      %s58 = sadd.s32 %s57, 1
      %p61 = scmp.eq.s32.totalorder %s23, 1
      %p62 = scmp.ne.s32.totalorder %s57, %s59
      %p63 = scmp.eq.s32.totalorder %s23, 0
      %p64 = por %p62, %p63
      %p65 = scmp.ne.s32.totalorder %s57, %s59
      %p66 = scmp.eq.s32.totalorder %s28, 1
      %p67 = por %p65, %p66
      %p68 = scmp.ne.s32.totalorder %s59, %s60
      %p69 = scmp.eq.s32.totalorder %s28, 0
      %p70 = por %p68, %p69
      %p71 = scmp.ne.s32.totalorder %s59, %s60
      %p72 = scmp.eq.s32.totalorder %s29, 1
      %p73 = por %p71, %p72
      %p75 = scmp.ne.s32.totalorder %s60, %s74
      %p76 = scmp.eq.s32.totalorder %s29, 0
      %p77 = por %p75, %p76
      %s79 = sadd.s32 %s78, 1
      %p82 = scmp.eq.s32.totalorder %s23, 1
      %p83 = scmp.ne.s32.totalorder %s78, %s80
      %p84 = scmp.eq.s32.totalorder %s23, 0
      %p85 = por %p83, %p84
      %p86 = scmp.ne.s32.totalorder %s78, %s80
      %p87 = scmp.eq.s32.totalorder %s28, 1
      %p88 = por %p86, %p87
      %p89 = scmp.ne.s32.totalorder %s80, %s81
      %p90 = scmp.eq.s32.totalorder %s28, 0
      %p91 = por %p89, %p90
      %p92 = scmp.ne.s32.totalorder %s80, %s81
      %p93 = scmp.eq.s32.totalorder %s29, 1
      %p94 = por %p92, %p93
      %p96 = scmp.ne.s32.totalorder %s81, %s95
      %p97 = scmp.eq.s32.totalorder %s29, 0
      %p98 = por %p96, %p97
      %s100 = sadd.s32 %s99, 1
      %p103 = scmp.eq.s32.totalorder %s23, 1
      %p104 = scmp.ne.s32.totalorder %s99, %s101
      %p105 = scmp.eq.s32.totalorder %s23, 0
      %p106 = por %p104, %p105
      %p107 = scmp.ne.s32.totalorder %s99, %s101
      %p108 = scmp.eq.s32.totalorder %s28, 1
      %p109 = por %p107, %p108
      %p110 = scmp.ne.s32.totalorder %s101, %s102
      %p111 = scmp.eq.s32.totalorder %s28, 0
      %p112 = por %p110, %p111
      %p113 = scmp.ne.s32.totalorder %s101, %s102
      %p114 = scmp.eq.s32.totalorder %s29, 1
      %p115 = por %p113, %p114
      %p117 = scmp.ne.s32.totalorder %s102, %s116
      %p118 = scmp.eq.s32.totalorder %s29, 0
      %p119 = por %p117, %p118
      %s121 = sadd.s32 %s120, 1
      %p124 = scmp.eq.s32.totalorder %s23, 1
      %p125 = scmp.ne.s32.totalorder %s120, %s122
      %p126 = scmp.eq.s32.totalorder %s23, 0
      %p127 = por %p125, %p126
      %p128 = scmp.ne.s32.totalorder %s120, %s122
      %p129 = scmp.eq.s32.totalorder %s28, 1
      %p130 = por %p128, %p129
      %p131 = scmp.ne.s32.totalorder %s122, %s123
      %p132 = scmp.eq.s32.totalorder %s28, 0
      %p133 = por %p131, %p132
      %p134 = scmp.ne.s32.totalorder %s122, %s123
      %p135 = scmp.eq.s32.totalorder %s29, 1
      %p136 = por %p134, %p135
      %p138 = scmp.ne.s32.totalorder %s123, %s137
      %p139 = scmp.eq.s32.totalorder %s29, 0
      %p140 = por %p138, %p139
      %s142 = sadd.s32 %s141, 1
      %p145 = scmp.eq.s32.totalorder %s23, 1
      %p146 = scmp.ne.s32.totalorder %s141, %s143
      %p147 = scmp.eq.s32.totalorder %s23, 0
      %p148 = por %p146, %p147
      %p149 = scmp.ne.s32.totalorder %s141, %s143
      %p150 = scmp.eq.s32.totalorder %s28, 1
      %p151 = por %p149, %p150
      %p152 = scmp.ne.s32.totalorder %s143, %s144
      %p153 = scmp.eq.s32.totalorder %s28, 0
      %p154 = por %p152, %p153
      %p155 = scmp.ne.s32.totalorder %s143, %s144
      %p156 = scmp.eq.s32.totalorder %s29, 1
      %p157 = por %p155, %p156
      %p159 = scmp.ne.s32.totalorder %s144, %s158
      %p160 = scmp.eq.s32.totalorder %s29, 0
      %p161 = por %p159, %p160
      %s163 = sadd.s32 %s162, 1
      %p166 = scmp.eq.s32.totalorder %s23, 1
      %p167 = scmp.ne.s32.totalorder %s162, %s164
      %p168 = scmp.eq.s32.totalorder %s23, 0
      %p169 = por %p167, %p168
      %p170 = scmp.ne.s32.totalorder %s162, %s164
      %p171 = scmp.eq.s32.totalorder %s28, 1
      %p172 = por %p170, %p171
      %p173 = scmp.ne.s32.totalorder %s164, %s165
      %p174 = scmp.eq.s32.totalorder %s28, 0
      %p175 = por %p173, %p174
      %p176 = scmp.ne.s32.totalorder %s164, %s165
      %p177 = scmp.eq.s32.totalorder %s29, 1
      %p178 = por %p176, %p177
      %p180 = scmp.ne.s32.totalorder %s165, %s179
      %p181 = scmp.eq.s32.totalorder %s29, 0
      %p182 = por %p180, %p181
      %s184 = sadd.s32 %s183, 1
      %p187 = scmp.eq.s32.totalorder %s23, 1
      %p188 = scmp.ne.s32.totalorder %s183, %s185
      %p189 = scmp.eq.s32.totalorder %s23, 0
      %p190 = por %p188, %p189
      %p191 = scmp.ne.s32.totalorder %s183, %s185
      %p192 = scmp.eq.s32.totalorder %s28, 1
      %p193 = por %p191, %p192
      %p194 = scmp.ne.s32.totalorder %s185, %s186
      %p195 = scmp.eq.s32.totalorder %s28, 0
      %p196 = por %p194, %p195
      %p197 = scmp.ne.s32.totalorder %s185, %s186
      %p198 = scmp.eq.s32.totalorder %s29, 1
      %p199 = por %p197, %p198
      %p201 = scmp.ne.s32.totalorder %s186, %s200
      %p202 = scmp.eq.s32.totalorder %s29, 0
      %p203 = por %p201, %p202
      %s205 = sadd.s32 %s204, 1
      %p208 = scmp.eq.s32.totalorder %s23, 1
      %p209 = scmp.ne.s32.totalorder %s204, %s206
      %p210 = scmp.eq.s32.totalorder %s23, 0
      %p211 = por %p209, %p210
      %p212 = scmp.ne.s32.totalorder %s204, %s206
      %p213 = scmp.eq.s32.totalorder %s28, 1
      %p214 = por %p212, %p213
      %p215 = scmp.ne.s32.totalorder %s206, %s207
      %p216 = scmp.eq.s32.totalorder %s28, 0
      %p217 = por %p215, %p216
      %p218 = scmp.ne.s32.totalorder %s206, %s207
      %p219 = scmp.eq.s32.totalorder %s29, 1
      %p220 = por %p218, %p219
      %p222 = scmp.ne.s32.totalorder %s207, %s221
      %p223 = scmp.eq.s32.totalorder %s29, 0
      %p224 = por %p222, %p223
      %s225 = ssub.s32 %s23, %s30
      %p226 = scmp.eq.s32.totalorder %s225, 0
      %s228 = sadd.s32 %s227, 1
      %s229 = scalar_select %p226, %s227, %s228
      %p232 = pneg %p226
      %p233 = scmp.eq.s32.totalorder %s23, 1
      %p234 = por %p232, %p233
      %p235 = scmp.ne.s32.totalorder %s227, %s230
      %p236 = scmp.eq.s32.totalorder %s23, 0
      %p237 = por %p235, %p236
      %p238 = scmp.ne.s32.totalorder %s227, %s230
      %p239 = scmp.eq.s32.totalorder %s28, 1
      %p240 = por %p238, %p239
      %p241 = scmp.ne.s32.totalorder %s230, %s231
      %p242 = scmp.eq.s32.totalorder %s28, 0
      %p243 = por %p241, %p242
      %p244 = scmp.ne.s32.totalorder %s230, %s231
      %p245 = scmp.eq.s32.totalorder %s29, 1
      %p246 = por %p244, %p245
      %p248 = scmp.ne.s32.totalorder %s231, %s247
      %p249 = scmp.eq.s32.totalorder %s29, 0
      %p250 = por %p248, %p249
      %p251 = scmp.le.s32.totalorder 1, %s23
      %p252 = scmp.lt.s32.totalorder %s23, 3
      %p253 = pnand %p251, %p252
      %p254 = pneg %p253
      // Predicated region
      $region9: #{tpu_custom_call.1} parent=5 // pred_check
        _
      $region10: #{tpu_custom_call.1} parent=5 // pred_check_branch
        %256 = sbr.rel (%p253) target = $region12
      $region11: #{tpu_custom_call.1} parent=5 // pred_region
        %s257 = ssub.s32 %s23, 1
        // Predicated region
        $region13: #{tpu_custom_call.1} parent=11 // pred_check
          %p258 = pneg %p70
        $region14: #{tpu_custom_call.1} parent=11 // pred_check_branch
          %260 = sbr.rel (%p258) target = $region16
        $region15: #{tpu_custom_call.1} parent=11 // pred_region
          %s262 = ssub.s32 2048, 2048
          %263 = vsyncadd [#allocation6], %s262
          %s264 = sshll.u32 [#allocation5], 4
          %s265 = int_to_ptr.vmem [resolvable:$true] %s264
          %270 = dma.hbm_to_vmem [thread:$0]  %s1, 2048, %s265, [#allocation6], 128, 128, 8
        $region16: #{tpu_custom_call.1} parent=11 // pred_fallthru
          _
        // Predicated region
        $region17: #{tpu_custom_call.1} parent=11 // pred_check
          %p271 = pneg %p91
        $region18: #{tpu_custom_call.1} parent=11 // pred_check_branch
          %273 = sbr.rel (%p271) target = $region20
        $region19: #{tpu_custom_call.1} parent=11 // pred_region
          _
        $region20: #{tpu_custom_call.1} parent=11 // pred_fallthru
          _
        // Predicated region
        $region21: #{tpu_custom_call.1} parent=11 // pred_check
          %p274 = pneg %p112
        $region22: #{tpu_custom_call.1} parent=11 // pred_check_branch
          %276 = sbr.rel (%p274) target = $region24
        $region23: #{tpu_custom_call.1} parent=11 // pred_region
          %s278 = ssub.s32 2048, 2048
          %279 = vsyncadd [#allocation6], %s278
          %s280 = sshll.u32 [#allocation7], 4
          %s281 = int_to_ptr.vmem [resolvable:$true] %s280
          %286 = dma.hbm_to_vmem [thread:$0]  %s3, 2048, %s281, [#allocation6], 128, 128, 8
        $region24: #{tpu_custom_call.1} parent=11 // pred_fallthru
          _
        // Predicated region
        $region25: #{tpu_custom_call.1} parent=11 // pred_check
          %p287 = pneg %p133
        $region26: #{tpu_custom_call.1} parent=11 // pred_check_branch
          %289 = sbr.rel (%p287) target = $region28
        $region27: #{tpu_custom_call.1} parent=11 // pred_region
          _
        $region28: #{tpu_custom_call.1} parent=11 // pred_fallthru
          _
        // Predicated region
        $region29: #{tpu_custom_call.1} parent=11 // pred_check
          %p290 = pneg %p154
        $region30: #{tpu_custom_call.1} parent=11 // pred_check_branch
          %292 = sbr.rel (%p290) target = $region32
        $region31: #{tpu_custom_call.1} parent=11 // pred_region
          %s294 = ssub.s32 2048, 2048
          %295 = vsyncadd [#allocation9], %s294
          %s296 = sshll.u32 [#allocation8], 4
          %s297 = int_to_ptr.vmem [resolvable:$true] %s296
          %302 = dma.hbm_to_vmem [thread:$0]  %s5, 2048, %s297, [#allocation9], 128, 128, 8
        $region32: #{tpu_custom_call.1} parent=11 // pred_fallthru
          _
        // Predicated region
        $region33: #{tpu_custom_call.1} parent=11 // pred_check
          %p303 = pneg %p175
        $region34: #{tpu_custom_call.1} parent=11 // pred_check_branch
          %305 = sbr.rel (%p303) target = $region36
        $region35: #{tpu_custom_call.1} parent=11 // pred_region
          _
        $region36: #{tpu_custom_call.1} parent=11 // pred_fallthru
          _
        // Predicated region
        $region37: #{tpu_custom_call.1} parent=11 // pred_check
          %p306 = pneg %p196
        $region38: #{tpu_custom_call.1} parent=11 // pred_check_branch
          %308 = sbr.rel (%p306) target = $region40
        $region39: #{tpu_custom_call.1} parent=11 // pred_region
          %s310 = ssub.s32 2048, 2048
          %311 = vsyncadd [#allocation9], %s310
          %s312 = sshll.u32 [#allocation10], 4
          %s313 = int_to_ptr.vmem [resolvable:$true] %s312
          %318 = dma.hbm_to_vmem [thread:$0]  %s7, 2048, %s313, [#allocation9], 128, 128, 8
        $region40: #{tpu_custom_call.1} parent=11 // pred_fallthru
          _
        // Predicated region
        $region41: #{tpu_custom_call.1} parent=11 // pred_check
          %p319 = pneg %p217
        $region42: #{tpu_custom_call.1} parent=11 // pred_check_branch
          %321 = sbr.rel (%p319) target = $region44
        $region43: #{tpu_custom_call.1} parent=11 // pred_region
          _
        $region44: #{tpu_custom_call.1} parent=11 // pred_fallthru
          _
      $region12: #{tpu_custom_call.1} parent=5 // pred_fallthru
        _
      %p322 = scmp.lt.s32.totalorder %s23, 2
      // Predicated region
      $region45: #{tpu_custom_call.1} parent=5 // pred_check
        %p323 = pneg %p322
      $region46: #{tpu_custom_call.1} parent=5 // pred_check_branch
        %325 = sbr.rel (%p323) target = $region48
      $region47: #{tpu_custom_call.1} parent=5 // pred_region
        // Predicated region
        $region49: #{tpu_custom_call.1} parent=47 // pred_check
          %p326 = pneg %p43
        $region50: #{tpu_custom_call.1} parent=47 // pred_check_branch
          %328 = sbr.rel (%p326) target = $region52
        $region51: #{tpu_custom_call.1} parent=47 // pred_region
          %s329 = sand.u32 %s33, 1
          %s330 = scalar_lea.sflag [#allocation3], %s329
          %s331 = sand.u32 %s33, 1
          %s332 = smul.addr %s331, 64
          %s333 = scalar_lea.vmem [#allocation2], %s332
          %s334 = smul.u32 8, %s23
          %s336 = ssub.s32 1024, 1024
          %337 = vsyncadd %s330, %s336
          %s338 = smul.addr %s334, 128
          %s339 = scalar_lea.hbm %s0, %s338
          %s340 = sshll.u32 %s333, 4
          %s341 = int_to_ptr.vmem [resolvable:$true] %s340
          %346 = dma.hbm_to_vmem [thread:$0]  %s339, 1024, %s341, %s330, 128, 128, 8
        $region52: #{tpu_custom_call.1} parent=47 // pred_fallthru
          _
      $region48: #{tpu_custom_call.1} parent=5 // pred_fallthru
        _
      %p347 = scmp.le.s32.totalorder 1, %s23
      %p348 = scmp.lt.s32.totalorder %s23, 3
      %p349 = pnand %p347, %p348
      %p350 = pneg %p349
      // Predicated region
      $region53: #{tpu_custom_call.1} parent=5 // pred_check
        _
      $region54: #{tpu_custom_call.1} parent=5 // pred_check_branch
        %352 = sbr.rel (%p349) target = $region56
      $region55: #{tpu_custom_call.1} parent=5 // pred_region
        %s353 = ssub.s32 %s23, 1
        %s354 = sand.u32 %s36, 1
        %s355 = scalar_lea.sflag [#allocation3], %s354
        %s356 = sand.u32 %s36, 1
        %s357 = smul.addr %s356, 64
        %s358 = scalar_lea.vmem [#allocation2], %s357
        // Predicated region
        $region57: #{tpu_custom_call.1} parent=55 // pred_check
          %p359 = pneg %p49
        $region58: #{tpu_custom_call.1} parent=55 // pred_check_branch
          %361 = sbr.rel (%p359) target = $region60
        $region59: #{tpu_custom_call.1} parent=55 // pred_region
          %362 = dma.done %s355, 1024
        $region60: #{tpu_custom_call.1} parent=55 // pred_fallthru
          _
        // Predicated region
        $region61: #{tpu_custom_call.1} parent=55 // pred_check
          %p363 = pneg %p70
        $region62: #{tpu_custom_call.1} parent=55 // pred_check_branch
          %365 = sbr.rel (%p363) target = $region64
        $region63: #{tpu_custom_call.1} parent=55 // pred_region
          %366 = dma.done [#allocation6], 2048
        $region64: #{tpu_custom_call.1} parent=55 // pred_fallthru
          _
        // Predicated region
        $region65: #{tpu_custom_call.1} parent=55 // pred_check
          %p367 = pneg %p112
        $region66: #{tpu_custom_call.1} parent=55 // pred_check_branch
          %369 = sbr.rel (%p367) target = $region68
        $region67: #{tpu_custom_call.1} parent=55 // pred_region
          %370 = dma.done [#allocation6], 2048
        $region68: #{tpu_custom_call.1} parent=55 // pred_fallthru
          _
        // Predicated region
        $region69: #{tpu_custom_call.1} parent=55 // pred_check
          %p371 = pneg %p154
        $region70: #{tpu_custom_call.1} parent=55 // pred_check_branch
          %373 = sbr.rel (%p371) target = $region72
        $region71: #{tpu_custom_call.1} parent=55 // pred_region
          %374 = dma.done [#allocation9], 2048
        $region72: #{tpu_custom_call.1} parent=55 // pred_fallthru
          _
        // Predicated region
        $region73: #{tpu_custom_call.1} parent=55 // pred_check
          %p375 = pneg %p196
        $region74: #{tpu_custom_call.1} parent=55 // pred_check_branch
          %377 = sbr.rel (%p375) target = $region76
        $region75: #{tpu_custom_call.1} parent=55 // pred_region
          %378 = dma.done [#allocation9], 2048
        $region76: #{tpu_custom_call.1} parent=55 // pred_fallthru
          _
        %s379 = sand.u32 %s36, 1
        %s380 = scalar_lea.sflag [#allocation3], %s379
        %s381 = sand.u32 %s36, 1
        %s382 = smul.addr %s381, 64
        %s383 = scalar_lea.vmem [#allocation2], %s382
        %p384 = pneg %p49
        %p385 = pneg %p46
        %p386 = pneg %p70
        %p387 = pneg %p67
        %p388 = pneg %p91
        %p389 = pneg %p88
        %p390 = pneg %p112
        %p391 = pneg %p109
        %p392 = pneg %p133
        %p393 = pneg %p130
        %p394 = pneg %p154
        %p395 = pneg %p151
        %p396 = pneg %p175
        %p397 = pneg %p172
        %p398 = pneg %p196
        %p399 = pneg %p193
        %p400 = pneg %p217
        %p401 = pneg %p214
        %p402 = pneg %p243
        %p403 = pneg %p240
        %s404 = sand.u32 %s230, 1
        %s405 = scalar_lea.sflag [#allocation4], %s404
        %s406 = sand.u32 %s230, 1
        %s407 = smul.addr %s406, 64
        %s408 = scalar_lea.vmem [#allocation11], %s407
        %s409 = smul.u32 8, %s28
        %s410 = smul.u32 8, %s28
        %v411 = vld [vmem:[%s358] sm:$0xff]
        %v412 = vld [vmem:[%s358 + $0x8] sm:$0xff]
        %v413 = vld [vmem:[%s358 + $0x10] sm:$0xff]
        %v414 = vld [vmem:[%s358 + $0x18] sm:$0xff]
        %v415 = vld [vmem:[%s358 + $0x20] sm:$0xff]
        %v416 = vld [vmem:[%s358 + $0x28] sm:$0xff]
        %v417 = vld [vmem:[%s358 + $0x30] sm:$0xff]
        %v418 = vld [vmem:[%s358 + $0x38] sm:$0xff]
        %v419 = vld [vmem:[#allocation5] sm:$0xff]
        %v420 = vld [vmem:[#allocation5 + $0x8] sm:$0xff]
        %v421 = vld [vmem:[#allocation5 + $0x10] sm:$0xff]
        %v422 = vld [vmem:[#allocation5 + $0x18] sm:$0xff]
        %v423 = vld [vmem:[#allocation5 + $0x20] sm:$0xff]
        %v424 = vld [vmem:[#allocation5 + $0x28] sm:$0xff]
        %v425 = vld [vmem:[#allocation5 + $0x30] sm:$0xff]
        %v426 = vld [vmem:[#allocation5 + $0x38] sm:$0xff]
        %v427 = vld [vmem:[#allocation5 + $0x40] sm:$0xff]
        %v428 = vld [vmem:[#allocation5 + $0x48] sm:$0xff]
        %v429 = vld [vmem:[#allocation5 + $0x50] sm:$0xff]
        %v430 = vld [vmem:[#allocation5 + $0x58] sm:$0xff]
        %v431 = vld [vmem:[#allocation5 + $0x60] sm:$0xff]
        %v432 = vld [vmem:[#allocation5 + $0x68] sm:$0xff]
        %v433 = vld [vmem:[#allocation5 + $0x70] sm:$0xff]
        %v434 = vld [vmem:[#allocation5 + $0x78] sm:$0xff]
        %v435 = vld [vmem:[%s2] sm:$0x1]
        %v437 = vlaneseq
        %v438 = vshrl.u32 %v437, 7
        %v439 = vsub.s32 0, %v438
        %v440 = vrot.slane %v435, %v439
        %442 = vmatprep.subr.mxu0 0.0
        %443 = vmatpush1.msra.mxu0 %v419
        %444 = vmatprep.subr.mxu0 0.0
        %445 = vmatpush1.msra.mxu0 %v420
        %446 = vmatprep.subr.mxu0 0.0
        %447 = vmatpush1.msra.mxu0 %v421
        %448 = vmatprep.subr.mxu0 0.0
        %449 = vmatpush1.msra.mxu0 %v422
        %450 = vmatprep.subr.mxu0 0.0
        %451 = vmatpush1.msra.mxu0 %v423
        %452 = vmatprep.subr.mxu0 0.0
        %453 = vmatpush1.msra.mxu0 %v424
        %454 = vmatprep.subr.mxu0 0.0
        %455 = vmatpush1.msra.mxu0 %v425
        %456 = vmatprep.subr.mxu0 0.0
        %457 = vmatpush1.msra.mxu0 %v426
        %458 = vmatprep.subr.mxu0 0.0
        %459 = vmatpush1.msra.mxu0 %v427
        %460 = vmatprep.subr.mxu0 0.0
        %461 = vmatpush1.msra.mxu0 %v428
        %462 = vmatprep.subr.mxu0 0.0
        %463 = vmatpush1.msra.mxu0 %v429
        %464 = vmatprep.subr.mxu0 0.0
        %465 = vmatpush1.msra.mxu0 %v430
        %466 = vmatprep.subr.mxu0 0.0
        %467 = vmatpush1.msra.mxu0 %v431
        %468 = vmatprep.subr.mxu0 0.0
        %469 = vmatpush1.msra.mxu0 %v432
        %470 = vmatprep.subr.mxu0 0.0
        %471 = vmatpush1.msra.mxu0 %v433
        %472 = vmatprep.subr.mxu0 0.0
        %473 = vmatpush1.msra.mxu0 %v434
        %474 = vmatprep.subr.mxu0 0.0
        %475 = vmatpush1.msra.mxu0 0.0
        %476 = vmatprep.subr.mxu0 0.0
        %477 = vmatpush1.msra.mxu0 0.0
        %478 = vmatprep.subr.mxu0 0.0
        %479 = vmatpush1.msra.mxu0 0.0
        %480 = vmatprep.subr.mxu0 0.0
        %481 = vmatpush1.msra.mxu0 0.0
        %482 = vmatprep.subr.mxu0 0.0
        %483 = vmatpush1.msra.mxu0 0.0
        %484 = vmatprep.subr.mxu0 0.0
        %485 = vmatpush1.msra.mxu0 0.0
        %486 = vmatprep.subr.mxu0 0.0
        %487 = vmatpush1.msra.mxu0 0.0
        %488 = vmatprep.subr.mxu0 0.0
        %489 = vmatpush1.msra.mxu0 0.0
        %490 = vmatprep.subr.mxu0 0.0
        %491 = vmatpush1.msra.mxu0 0.0
        %492 = vmatprep.subr.mxu0 0.0
        %493 = vmatpush1.msra.mxu0 0.0
        %494 = vmatprep.subr.mxu0 0.0
        %495 = vmatpush1.msra.mxu0 0.0
        %496 = vmatprep.subr.mxu0 0.0
        %497 = vmatpush1.msra.mxu0 0.0
        %498 = vmatprep.subr.mxu0 0.0
        %499 = vmatpush1.msra.mxu0 0.0
        %500 = vmatprep.subr.mxu0 0.0
        %501 = vmatpush1.msra.mxu0 0.0
        %502 = vmatprep.subr.mxu0 0.0
        %503 = vmatpush1.msra.mxu0 0.0
        %504 = vmatprep.subr.mxu0 0.0
        %505 = vmatpush1.msra.mxu0 0.0
        %506 = vmatprep.mubr.f32.mxu0 0.0
        %507 = vmatmul.mubr.f32.gmra.mrb[0].mxu0 %v411
        %v508 = vpop.f32.mrb[0].mxu0
        %v509 = vadd.f32 %v440, %v508
        %v510 = vpop.f32.mrb[0].mxu0
        %511 = vmatprep.mubr.f32.mxu0 0.0
        %512 = vmatmul.mubr.f32.gmra.mrb[0].mxu0 %v412
        %v513 = vpop.f32.mrb[0].mxu0
        %v514 = vadd.f32 %v440, %v513
        %v515 = vpop.f32.mrb[0].mxu0
        %516 = vmatprep.mubr.f32.mxu0 0.0
        %517 = vmatmul.mubr.f32.gmra.mrb[0].mxu0 %v413
        %v518 = vpop.f32.mrb[0].mxu0
        %v519 = vadd.f32 %v440, %v518
        %v520 = vpop.f32.mrb[0].mxu0
        %521 = vmatprep.mubr.f32.mxu0 0.0
        %522 = vmatmul.mubr.f32.gmra.mrb[0].mxu0 %v414
        %v523 = vpop.f32.mrb[0].mxu0
        %v524 = vadd.f32 %v440, %v523
        %v525 = vpop.f32.mrb[0].mxu0
        %526 = vmatprep.mubr.f32.mxu0 0.0
        %527 = vmatmul.mubr.f32.gmra.mrb[0].mxu0 %v415
        %v528 = vpop.f32.mrb[0].mxu0
        %v529 = vadd.f32 %v440, %v528
        %v530 = vpop.f32.mrb[0].mxu0
        %531 = vmatprep.mubr.f32.mxu0 0.0
        %532 = vmatmul.mubr.f32.gmra.mrb[0].mxu0 %v416
        %v533 = vpop.f32.mrb[0].mxu0
        %v534 = vadd.f32 %v440, %v533
        %v535 = vpop.f32.mrb[0].mxu0
        %536 = vmatprep.mubr.f32.mxu0 0.0
        %537 = vmatmul.mubr.f32.gmra.mrb[0].mxu0 %v417
        %v538 = vpop.f32.mrb[0].mxu0
        %v539 = vadd.f32 %v440, %v538
        %v540 = vpop.f32.mrb[0].mxu0
        %541 = vmatprep.mubr.f32.mxu0 0.0
        %542 = vmatmul.mubr.f32.gmra.mrb[0].mxu0 %v418
        %v543 = vpop.f32.mrb[0].mxu0
        %v544 = vadd.f32 %v440, %v543
        %v545 = vpop.f32.mrb[0].mxu0
        %546 = vdwg.mxu0
        %v547 = vmax.f32 %v509, 0.0
        %v548 = vmax.f32 %v514, 0.0
        %v549 = vmax.f32 %v519, 0.0
        %v550 = vmax.f32 %v524, 0.0
        %v551 = vmax.f32 %v529, 0.0
        %v552 = vmax.f32 %v534, 0.0
        %v553 = vmax.f32 %v539, 0.0
        %v554 = vmax.f32 %v544, 0.0
        %v555 = vld [vmem:[#allocation7] sm:$0xff]
        %v556 = vld [vmem:[#allocation7 + $0x8] sm:$0xff]
        %v557 = vld [vmem:[#allocation7 + $0x10] sm:$0xff]
        %v558 = vld [vmem:[#allocation7 + $0x18] sm:$0xff]
        %v559 = vld [vmem:[#allocation7 + $0x20] sm:$0xff]
        %v560 = vld [vmem:[#allocation7 + $0x28] sm:$0xff]
        %v561 = vld [vmem:[#allocation7 + $0x30] sm:$0xff]
        %v562 = vld [vmem:[#allocation7 + $0x38] sm:$0xff]
        %v563 = vld [vmem:[#allocation7 + $0x40] sm:$0xff]
        %v564 = vld [vmem:[#allocation7 + $0x48] sm:$0xff]
        %v565 = vld [vmem:[#allocation7 + $0x50] sm:$0xff]
        %v566 = vld [vmem:[#allocation7 + $0x58] sm:$0xff]
        %v567 = vld [vmem:[#allocation7 + $0x60] sm:$0xff]
        %v568 = vld [vmem:[#allocation7 + $0x68] sm:$0xff]
        %v569 = vld [vmem:[#allocation7 + $0x70] sm:$0xff]
        %v570 = vld [vmem:[#allocation7 + $0x78] sm:$0xff]
        %v571 = vld [vmem:[%s4] sm:$0x1]
        %v573 = vlaneseq
        %v574 = vshrl.u32 %v573, 7
        %v575 = vsub.s32 0, %v574
        %v576 = vrot.slane %v571, %v575
        %578 = vmatprep.subr.mxu0 0.0
        %579 = vmatpush1.msra.mxu0 %v555
        %580 = vmatprep.subr.mxu0 0.0
        %581 = vmatpush1.msra.mxu0 %v556
        %582 = vmatprep.subr.mxu0 0.0
        %583 = vmatpush1.msra.mxu0 %v557
        %584 = vmatprep.subr.mxu0 0.0
        %585 = vmatpush1.msra.mxu0 %v558
        %586 = vmatprep.subr.mxu0 0.0
        %587 = vmatpush1.msra.mxu0 %v559
        %588 = vmatprep.subr.mxu0 0.0
        %589 = vmatpush1.msra.mxu0 %v560
        %590 = vmatprep.subr.mxu0 0.0
        %591 = vmatpush1.msra.mxu0 %v561
        %592 = vmatprep.subr.mxu0 0.0
        %593 = vmatpush1.msra.mxu0 %v562
        %594 = vmatprep.subr.mxu0 0.0
        %595 = vmatpush1.msra.mxu0 %v563
        %596 = vmatprep.subr.mxu0 0.0
        %597 = vmatpush1.msra.mxu0 %v564
        %598 = vmatprep.subr.mxu0 0.0
        %599 = vmatpush1.msra.mxu0 %v565
        %600 = vmatprep.subr.mxu0 0.0
        %601 = vmatpush1.msra.mxu0 %v566
        %602 = vmatprep.subr.mxu0 0.0
        %603 = vmatpush1.msra.mxu0 %v567
        %604 = vmatprep.subr.mxu0 0.0
        %605 = vmatpush1.msra.mxu0 %v568
        %606 = vmatprep.subr.mxu0 0.0
        %607 = vmatpush1.msra.mxu0 %v569
        %608 = vmatprep.subr.mxu0 0.0
        %609 = vmatpush1.msra.mxu0 %v570
        %610 = vmatprep.subr.mxu0 0.0
        %611 = vmatpush1.msra.mxu0 0.0
        %612 = vmatprep.subr.mxu0 0.0
        %613 = vmatpush1.msra.mxu0 0.0
        %614 = vmatprep.subr.mxu0 0.0
        %615 = vmatpush1.msra.mxu0 0.0
        %616 = vmatprep.subr.mxu0 0.0
        %617 = vmatpush1.msra.mxu0 0.0
        %618 = vmatprep.subr.mxu0 0.0
        %619 = vmatpush1.msra.mxu0 0.0
        %620 = vmatprep.subr.mxu0 0.0
        %621 = vmatpush1.msra.mxu0 0.0
        %622 = vmatprep.subr.mxu0 0.0
        %623 = vmatpush1.msra.mxu0 0.0
        %624 = vmatprep.subr.mxu0 0.0
        %625 = vmatpush1.msra.mxu0 0.0
        %626 = vmatprep.subr.mxu0 0.0
        %627 = vmatpush1.msra.mxu0 0.0
        %628 = vmatprep.subr.mxu0 0.0
        %629 = vmatpush1.msra.mxu0 0.0
        %630 = vmatprep.subr.mxu0 0.0
        %631 = vmatpush1.msra.mxu0 0.0
        %632 = vmatprep.subr.mxu0 0.0
        %633 = vmatpush1.msra.mxu0 0.0
        %634 = vmatprep.subr.mxu0 0.0
        %635 = vmatpush1.msra.mxu0 0.0
        %636 = vmatprep.subr.mxu0 0.0
        %637 = vmatpush1.msra.mxu0 0.0
        %638 = vmatprep.subr.mxu0 0.0
        %639 = vmatpush1.msra.mxu0 0.0
        %640 = vmatprep.subr.mxu0 0.0
        %641 = vmatpush1.msra.mxu0 0.0
        %642 = vmatprep.mubr.f32.mxu0 0.0
        %643 = vmatmul.mubr.f32.gmra.mrb[0].mxu0 %v547
        %v644 = vpop.f32.mrb[0].mxu0
        %v645 = vadd.f32 %v576, %v644
        %v646 = vpop.f32.mrb[0].mxu0
        %647 = vmatprep.mubr.f32.mxu0 0.0
        %648 = vmatmul.mubr.f32.gmra.mrb[0].mxu0 %v548
        %v649 = vpop.f32.mrb[0].mxu0
        %v650 = vadd.f32 %v576, %v649
        %v651 = vpop.f32.mrb[0].mxu0
        %652 = vmatprep.mubr.f32.mxu0 0.0
        %653 = vmatmul.mubr.f32.gmra.mrb[0].mxu0 %v549
        %v654 = vpop.f32.mrb[0].mxu0
        %v655 = vadd.f32 %v576, %v654
        %v656 = vpop.f32.mrb[0].mxu0
        %657 = vmatprep.mubr.f32.mxu0 0.0
        %658 = vmatmul.mubr.f32.gmra.mrb[0].mxu0 %v550
        %v659 = vpop.f32.mrb[0].mxu0
        %v660 = vadd.f32 %v576, %v659
        %v661 = vpop.f32.mrb[0].mxu0
        %662 = vmatprep.mubr.f32.mxu0 0.0
        %663 = vmatmul.mubr.f32.gmra.mrb[0].mxu0 %v551
        %v664 = vpop.f32.mrb[0].mxu0
        %v665 = vadd.f32 %v576, %v664
        %v666 = vpop.f32.mrb[0].mxu0
        %667 = vmatprep.mubr.f32.mxu0 0.0
        %668 = vmatmul.mubr.f32.gmra.mrb[0].mxu0 %v552
        %v669 = vpop.f32.mrb[0].mxu0
        %v670 = vadd.f32 %v576, %v669
        %v671 = vpop.f32.mrb[0].mxu0
        %672 = vmatprep.mubr.f32.mxu0 0.0
        %673 = vmatmul.mubr.f32.gmra.mrb[0].mxu0 %v553
        %v674 = vpop.f32.mrb[0].mxu0
        %v675 = vadd.f32 %v576, %v674
        %v676 = vpop.f32.mrb[0].mxu0
        %677 = vmatprep.mubr.f32.mxu0 0.0
        %678 = vmatmul.mubr.f32.gmra.mrb[0].mxu0 %v554
        %v679 = vpop.f32.mrb[0].mxu0
        %v680 = vadd.f32 %v576, %v679
        %v681 = vpop.f32.mrb[0].mxu0
        %682 = vdwg.mxu0
        %v683 = vmax.f32 %v645, 0.0
        %v684 = vmax.f32 %v650, 0.0
        %v685 = vmax.f32 %v655, 0.0
        %v686 = vmax.f32 %v660, 0.0
        %v687 = vmax.f32 %v665, 0.0
        %v688 = vmax.f32 %v670, 0.0
        %v689 = vmax.f32 %v675, 0.0
        %v690 = vmax.f32 %v680, 0.0
        %v691 = vld [vmem:[#allocation8] sm:$0xff]
        %v692 = vld [vmem:[#allocation8 + $0x8] sm:$0xff]
        %v693 = vld [vmem:[#allocation8 + $0x10] sm:$0xff]
        %v694 = vld [vmem:[#allocation8 + $0x18] sm:$0xff]
        %v695 = vld [vmem:[#allocation8 + $0x20] sm:$0xff]
        %v696 = vld [vmem:[#allocation8 + $0x28] sm:$0xff]
        %v697 = vld [vmem:[#allocation8 + $0x30] sm:$0xff]
        %v698 = vld [vmem:[#allocation8 + $0x38] sm:$0xff]
        %v699 = vld [vmem:[#allocation8 + $0x40] sm:$0xff]
        %v700 = vld [vmem:[#allocation8 + $0x48] sm:$0xff]
        %v701 = vld [vmem:[#allocation8 + $0x50] sm:$0xff]
        %v702 = vld [vmem:[#allocation8 + $0x58] sm:$0xff]
        %v703 = vld [vmem:[#allocation8 + $0x60] sm:$0xff]
        %v704 = vld [vmem:[#allocation8 + $0x68] sm:$0xff]
        %v705 = vld [vmem:[#allocation8 + $0x70] sm:$0xff]
        %v706 = vld [vmem:[#allocation8 + $0x78] sm:$0xff]
        %v707 = vld [vmem:[%s6] sm:$0x1]
        %v709 = vlaneseq
        %v710 = vshrl.u32 %v709, 7
        %v711 = vsub.s32 0, %v710
        %v712 = vrot.slane %v707, %v711
        %714 = vmatprep.subr.mxu0 0.0
        %715 = vmatpush1.msra.mxu0 %v691
        %716 = vmatprep.subr.mxu0 0.0
        %717 = vmatpush1.msra.mxu0 %v692
        %718 = vmatprep.subr.mxu0 0.0
        %719 = vmatpush1.msra.mxu0 %v693
        %720 = vmatprep.subr.mxu0 0.0
        %721 = vmatpush1.msra.mxu0 %v694
        %722 = vmatprep.subr.mxu0 0.0
        %723 = vmatpush1.msra.mxu0 %v695
        %724 = vmatprep.subr.mxu0 0.0
        %725 = vmatpush1.msra.mxu0 %v696
        %726 = vmatprep.subr.mxu0 0.0
        %727 = vmatpush1.msra.mxu0 %v697
        %728 = vmatprep.subr.mxu0 0.0
        %729 = vmatpush1.msra.mxu0 %v698
        %730 = vmatprep.subr.mxu0 0.0
        %731 = vmatpush1.msra.mxu0 %v699
        %732 = vmatprep.subr.mxu0 0.0
        %733 = vmatpush1.msra.mxu0 %v700
        %734 = vmatprep.subr.mxu0 0.0
        %735 = vmatpush1.msra.mxu0 %v701
        %736 = vmatprep.subr.mxu0 0.0
        %737 = vmatpush1.msra.mxu0 %v702
        %738 = vmatprep.subr.mxu0 0.0
        %739 = vmatpush1.msra.mxu0 %v703
        %740 = vmatprep.subr.mxu0 0.0
        %741 = vmatpush1.msra.mxu0 %v704
        %742 = vmatprep.subr.mxu0 0.0
        %743 = vmatpush1.msra.mxu0 %v705
        %744 = vmatprep.subr.mxu0 0.0
        %745 = vmatpush1.msra.mxu0 %v706
        %746 = vmatprep.subr.mxu0 0.0
        %747 = vmatpush1.msra.mxu0 0.0
        %748 = vmatprep.subr.mxu0 0.0
        %749 = vmatpush1.msra.mxu0 0.0
        %750 = vmatprep.subr.mxu0 0.0
        %751 = vmatpush1.msra.mxu0 0.0
        %752 = vmatprep.subr.mxu0 0.0
        %753 = vmatpush1.msra.mxu0 0.0
        %754 = vmatprep.subr.mxu0 0.0
        %755 = vmatpush1.msra.mxu0 0.0
        %756 = vmatprep.subr.mxu0 0.0
        %757 = vmatpush1.msra.mxu0 0.0
        %758 = vmatprep.subr.mxu0 0.0
        %759 = vmatpush1.msra.mxu0 0.0
        %760 = vmatprep.subr.mxu0 0.0
        %761 = vmatpush1.msra.mxu0 0.0
        %762 = vmatprep.subr.mxu0 0.0
        %763 = vmatpush1.msra.mxu0 0.0
        %764 = vmatprep.subr.mxu0 0.0
        %765 = vmatpush1.msra.mxu0 0.0
        %766 = vmatprep.subr.mxu0 0.0
        %767 = vmatpush1.msra.mxu0 0.0
        %768 = vmatprep.subr.mxu0 0.0
        %769 = vmatpush1.msra.mxu0 0.0
        %770 = vmatprep.subr.mxu0 0.0
        %771 = vmatpush1.msra.mxu0 0.0
        %772 = vmatprep.subr.mxu0 0.0
        %773 = vmatpush1.msra.mxu0 0.0
        %774 = vmatprep.subr.mxu0 0.0
        %775 = vmatpush1.msra.mxu0 0.0
        %776 = vmatprep.subr.mxu0 0.0
        %777 = vmatpush1.msra.mxu0 0.0
        %778 = vmatprep.mubr.f32.mxu0 0.0
        %779 = vmatmul.mubr.f32.gmra.mrb[0].mxu0 %v683
        %v780 = vpop.f32.mrb[0].mxu0
        %v781 = vadd.f32 %v712, %v780
        %v782 = vpop.f32.mrb[0].mxu0
        %783 = vmatprep.mubr.f32.mxu0 0.0
        %784 = vmatmul.mubr.f32.gmra.mrb[0].mxu0 %v684
        %v785 = vpop.f32.mrb[0].mxu0
        %v786 = vadd.f32 %v712, %v785
        %v787 = vpop.f32.mrb[0].mxu0
        %788 = vmatprep.mubr.f32.mxu0 0.0
        %789 = vmatmul.mubr.f32.gmra.mrb[0].mxu0 %v685
        %v790 = vpop.f32.mrb[0].mxu0
        %v791 = vadd.f32 %v712, %v790
        %v792 = vpop.f32.mrb[0].mxu0
        %793 = vmatprep.mubr.f32.mxu0 0.0
        %794 = vmatmul.mubr.f32.gmra.mrb[0].mxu0 %v686
        %v795 = vpop.f32.mrb[0].mxu0
        %v796 = vadd.f32 %v712, %v795
        %v797 = vpop.f32.mrb[0].mxu0
        %798 = vmatprep.mubr.f32.mxu0 0.0
        %799 = vmatmul.mubr.f32.gmra.mrb[0].mxu0 %v687
        %v800 = vpop.f32.mrb[0].mxu0
        %v801 = vadd.f32 %v712, %v800
        %v802 = vpop.f32.mrb[0].mxu0
        %803 = vmatprep.mubr.f32.mxu0 0.0
        %804 = vmatmul.mubr.f32.gmra.mrb[0].mxu0 %v688
        %v805 = vpop.f32.mrb[0].mxu0
        %v806 = vadd.f32 %v712, %v805
        %v807 = vpop.f32.mrb[0].mxu0
        %808 = vmatprep.mubr.f32.mxu0 0.0
        %809 = vmatmul.mubr.f32.gmra.mrb[0].mxu0 %v689
        %v810 = vpop.f32.mrb[0].mxu0
        %v811 = vadd.f32 %v712, %v810
        %v812 = vpop.f32.mrb[0].mxu0
        %813 = vmatprep.mubr.f32.mxu0 0.0
        %814 = vmatmul.mubr.f32.gmra.mrb[0].mxu0 %v690
        %v815 = vpop.f32.mrb[0].mxu0
        %v816 = vadd.f32 %v712, %v815
        %v817 = vpop.f32.mrb[0].mxu0
        %818 = vdwg.mxu0
        %v819 = vmax.f32 %v781, 0.0
        %v820 = vmax.f32 %v786, 0.0
        %v821 = vmax.f32 %v791, 0.0
        %v822 = vmax.f32 %v796, 0.0
        %v823 = vmax.f32 %v801, 0.0
        %v824 = vmax.f32 %v806, 0.0
        %v825 = vmax.f32 %v811, 0.0
        %v826 = vmax.f32 %v816, 0.0
        %v827 = vld [vmem:[#allocation10] sm:$0xff]
        %v828 = vld [vmem:[#allocation10 + $0x8] sm:$0xff]
        %v829 = vld [vmem:[#allocation10 + $0x10] sm:$0xff]
        %v830 = vld [vmem:[#allocation10 + $0x18] sm:$0xff]
        %v831 = vld [vmem:[#allocation10 + $0x20] sm:$0xff]
        %v832 = vld [vmem:[#allocation10 + $0x28] sm:$0xff]
        %v833 = vld [vmem:[#allocation10 + $0x30] sm:$0xff]
        %v834 = vld [vmem:[#allocation10 + $0x38] sm:$0xff]
        %v835 = vld [vmem:[#allocation10 + $0x40] sm:$0xff]
        %v836 = vld [vmem:[#allocation10 + $0x48] sm:$0xff]
        %v837 = vld [vmem:[#allocation10 + $0x50] sm:$0xff]
        %v838 = vld [vmem:[#allocation10 + $0x58] sm:$0xff]
        %v839 = vld [vmem:[#allocation10 + $0x60] sm:$0xff]
        %v840 = vld [vmem:[#allocation10 + $0x68] sm:$0xff]
        %v841 = vld [vmem:[#allocation10 + $0x70] sm:$0xff]
        %v842 = vld [vmem:[#allocation10 + $0x78] sm:$0xff]
        %v843 = vld [vmem:[%s8] sm:$0x1]
        %v845 = vlaneseq
        %v846 = vshrl.u32 %v845, 7
        %v847 = vsub.s32 0, %v846
        %v848 = vrot.slane %v843, %v847
        %850 = vmatprep.subr.mxu0 0.0
        %851 = vmatpush1.msra.mxu0 %v827
        %852 = vmatprep.subr.mxu0 0.0
        %853 = vmatpush1.msra.mxu0 %v828
        %854 = vmatprep.subr.mxu0 0.0
        %855 = vmatpush1.msra.mxu0 %v829
        %856 = vmatprep.subr.mxu0 0.0
        %857 = vmatpush1.msra.mxu0 %v830
        %858 = vmatprep.subr.mxu0 0.0
        %859 = vmatpush1.msra.mxu0 %v831
        %860 = vmatprep.subr.mxu0 0.0
        %861 = vmatpush1.msra.mxu0 %v832
        %862 = vmatprep.subr.mxu0 0.0
        %863 = vmatpush1.msra.mxu0 %v833
        %864 = vmatprep.subr.mxu0 0.0
        %865 = vmatpush1.msra.mxu0 %v834
        %866 = vmatprep.subr.mxu0 0.0
        %867 = vmatpush1.msra.mxu0 %v835
        %868 = vmatprep.subr.mxu0 0.0
        %869 = vmatpush1.msra.mxu0 %v836
        %870 = vmatprep.subr.mxu0 0.0
        %871 = vmatpush1.msra.mxu0 %v837
        %872 = vmatprep.subr.mxu0 0.0
        %873 = vmatpush1.msra.mxu0 %v838
        %874 = vmatprep.subr.mxu0 0.0
        %875 = vmatpush1.msra.mxu0 %v839
        %876 = vmatprep.subr.mxu0 0.0
        %877 = vmatpush1.msra.mxu0 %v840
        %878 = vmatprep.subr.mxu0 0.0
        %879 = vmatpush1.msra.mxu0 %v841
        %880 = vmatprep.subr.mxu0 0.0
        %881 = vmatpush1.msra.mxu0 %v842
        %882 = vmatprep.subr.mxu0 0.0
        %883 = vmatpush1.msra.mxu0 0.0
        %884 = vmatprep.subr.mxu0 0.0
        %885 = vmatpush1.msra.mxu0 0.0
        %886 = vmatprep.subr.mxu0 0.0
        %887 = vmatpush1.msra.mxu0 0.0
        %888 = vmatprep.subr.mxu0 0.0
        %889 = vmatpush1.msra.mxu0 0.0
        %890 = vmatprep.subr.mxu0 0.0
        %891 = vmatpush1.msra.mxu0 0.0
        %892 = vmatprep.subr.mxu0 0.0
        %893 = vmatpush1.msra.mxu0 0.0
        %894 = vmatprep.subr.mxu0 0.0
        %895 = vmatpush1.msra.mxu0 0.0
        %896 = vmatprep.subr.mxu0 0.0
        %897 = vmatpush1.msra.mxu0 0.0
        %898 = vmatprep.subr.mxu0 0.0
        %899 = vmatpush1.msra.mxu0 0.0
        %900 = vmatprep.subr.mxu0 0.0
        %901 = vmatpush1.msra.mxu0 0.0
        %902 = vmatprep.subr.mxu0 0.0
        %903 = vmatpush1.msra.mxu0 0.0
        %904 = vmatprep.subr.mxu0 0.0
        %905 = vmatpush1.msra.mxu0 0.0
        %906 = vmatprep.subr.mxu0 0.0
        %907 = vmatpush1.msra.mxu0 0.0
        %908 = vmatprep.subr.mxu0 0.0
        %909 = vmatpush1.msra.mxu0 0.0
        %910 = vmatprep.subr.mxu0 0.0
        %911 = vmatpush1.msra.mxu0 0.0
        %912 = vmatprep.subr.mxu0 0.0
        %913 = vmatpush1.msra.mxu0 0.0
        %914 = vmatprep.mubr.f32.mxu0 0.0
        %915 = vmatmul.mubr.f32.gmra.mrb[0].mxu0 %v819
        %v916 = vpop.f32.mrb[0].mxu0
        %v917 = vadd.f32 %v848, %v916
        %v918 = vpop.f32.mrb[0].mxu0
        %919 = vmatprep.mubr.f32.mxu0 0.0
        %920 = vmatmul.mubr.f32.gmra.mrb[0].mxu0 %v820
        %v921 = vpop.f32.mrb[0].mxu0
        %v922 = vadd.f32 %v848, %v921
        %v923 = vpop.f32.mrb[0].mxu0
        %924 = vmatprep.mubr.f32.mxu0 0.0
        %925 = vmatmul.mubr.f32.gmra.mrb[0].mxu0 %v821
        %v926 = vpop.f32.mrb[0].mxu0
        %v927 = vadd.f32 %v848, %v926
        %v928 = vpop.f32.mrb[0].mxu0
        %929 = vmatprep.mubr.f32.mxu0 0.0
        %930 = vmatmul.mubr.f32.gmra.mrb[0].mxu0 %v822
        %v931 = vpop.f32.mrb[0].mxu0
        %v932 = vadd.f32 %v848, %v931
        %v933 = vpop.f32.mrb[0].mxu0
        %934 = vmatprep.mubr.f32.mxu0 0.0
        %935 = vmatmul.mubr.f32.gmra.mrb[0].mxu0 %v823
        %v936 = vpop.f32.mrb[0].mxu0
        %v937 = vadd.f32 %v848, %v936
        %v938 = vpop.f32.mrb[0].mxu0
        %939 = vmatprep.mubr.f32.mxu0 0.0
        %940 = vmatmul.mubr.f32.gmra.mrb[0].mxu0 %v824
        %v941 = vpop.f32.mrb[0].mxu0
        %v942 = vadd.f32 %v848, %v941
        %v943 = vpop.f32.mrb[0].mxu0
        %944 = vmatprep.mubr.f32.mxu0 0.0
        %945 = vmatmul.mubr.f32.gmra.mrb[0].mxu0 %v825
        %v946 = vpop.f32.mrb[0].mxu0
        %v947 = vadd.f32 %v848, %v946
        %v948 = vpop.f32.mrb[0].mxu0
        %949 = vmatprep.mubr.f32.mxu0 0.0
        %950 = vmatmul.mubr.f32.gmra.mrb[0].mxu0 %v826
        %v951 = vpop.f32.mrb[0].mxu0
        %v952 = vadd.f32 %v848, %v951
        %v953 = vpop.f32.mrb[0].mxu0
        %954 = vdwg.mxu0
        %955 = vst [vmem:[%s408] sm:$0xff] %v917
        %956 = vst [vmem:[%s408 + $0x8] sm:$0xff] %v922
        %957 = vst [vmem:[%s408 + $0x10] sm:$0xff] %v927
        %958 = vst [vmem:[%s408 + $0x18] sm:$0xff] %v932
        %959 = vst [vmem:[%s408 + $0x20] sm:$0xff] %v937
        %960 = vst [vmem:[%s408 + $0x28] sm:$0xff] %v942
        %961 = vst [vmem:[%s408 + $0x30] sm:$0xff] %v947
        %962 = vst [vmem:[%s408 + $0x38] sm:$0xff] %v952
        %s963 = sand.u32 %s230, 1
        %s964 = scalar_lea.sflag [#allocation4], %s963
        %s965 = sand.u32 %s230, 1
        %s966 = smul.addr %s965, 64
        %s967 = scalar_lea.vmem [#allocation11], %s966
        // Predicated region
        $region77: #{tpu_custom_call.1} parent=55 // pred_check
          %p968 = pneg %p240
        $region78: #{tpu_custom_call.1} parent=55 // pred_check_branch
          %970 = sbr.rel (%p968) target = $region80
        $region79: #{tpu_custom_call.1} parent=55 // pred_region
          %s971 = smul.u32 8, %s28
          %s973 = ssub.s32 1024, 1024
          %974 = vsyncadd %s964, %s973
          %s975 = smul.addr %s971, 128
          %s976 = scalar_lea.hbm %s9, %s975
          %s977 = sshll.u32 %s967, 4
          %s978 = int_to_ptr.vmem [resolvable:$true] %s977
          %983 = dma.vmem_to_hbm [thread:$0]  %s978, 1024, %s976, %s964, 128, 128, 8
        $region80: #{tpu_custom_call.1} parent=55 // pred_fallthru
          _
      $region56: #{tpu_custom_call.1} parent=5 // pred_fallthru
        _
      %p984 = scmp.le.s32.totalorder 2, %s23
      // Predicated region
      $region81: #{tpu_custom_call.1} parent=5 // pred_check
        %p985 = pneg %p984
      $region82: #{tpu_custom_call.1} parent=5 // pred_check_branch
        %987 = sbr.rel (%p985) target = $region84
      $region83: #{tpu_custom_call.1} parent=5 // pred_region
        %s988 = ssub.s32 %s23, 2
        // Predicated region
        $region85: #{tpu_custom_call.1} parent=83 // pred_check
          %p989 = pneg %p246
        $region86: #{tpu_custom_call.1} parent=83 // pred_check_branch
          %991 = sbr.rel (%p989) target = $region88
        $region87: #{tpu_custom_call.1} parent=83 // pred_region
          %s992 = sand.u32 %s231, 1
          %s993 = scalar_lea.sflag [#allocation4], %s992
          %s994 = sand.u32 %s231, 1
          %s995 = smul.addr %s994, 64
          %s996 = scalar_lea.vmem [#allocation11], %s995
          %997 = dma.done %s993, 1024
        $region88: #{tpu_custom_call.1} parent=83 // pred_fallthru
          _
      $region84: #{tpu_custom_call.1} parent=5 // pred_fallthru
        _
    $region6: #{tpu_custom_call.1} parent=1 // loop_footer
      %s27 = sadd.s32 1, %s23
    $region7: #{tpu_custom_call.1} parent=1 // loop_footer_branch
      %22 = sbr.rel target = $region3
    $region8: #{tpu_custom_call.1} parent=1 // loop_exit
      _
    %998 = vsyncpa [#allocation3], 1
    %s999 = scalar_lea.sflag [#allocation3], 1
    %1000 = vsyncpa %s999, 1
    %1001 = vsyncpa [#allocation6], 1
    %1002 = vsyncpa [#allocation9], 1
    %1003 = vsyncpa [#allocation4], 1
    %s1004 = scalar_lea.sflag [#allocation4], 1
    %1005 = vsyncpa %s1004, 1

</llo_original>
